<compile_context>
chip_gen: v5e
topology: v5e:2x2
jax: 0.10.0
libtpu: 0.0.40
codegen_flags: <defaults>
</compile_context>

<pallas_src>
import functools

import jax
import jax.numpy as jnp
from jax import lax
from jax.experimental import pallas as pl
from jax.experimental.pallas import tpu as pltpu

BN_EPS = 1e-5


def make_divisible(v, divisor=8, min_value=None, round_limit=0.9):
    min_value = min_value or divisor
    new_v = max(min_value, int(v + divisor / 2) // divisor * divisor)
    if new_v < round_limit * v:
        new_v += divisor
    return new_v


def _choose_nb(N, HW, Cmid):
    """Images per grid step.

    Targets a long lane extent (NB*HW lanes) to amortize per-step pipeline
    overhead and MXU weight loads, while (a) keeping >=2 grid steps when N
    allows so step-to-step DMA/compute overlap (and both v7x TensorCores)
    stay fed, and (b) bounding the per-step live working set (~8 full
    (Cmid, NB*HW) f32 tiles) well under the v7x (64 MiB physical) VMEM budget.
    """
    nb = max(1, 2048 // max(HW, 1))                          # lane-extent target
    max_nb_vmem = max(1, (12 << 20) // max(1, 8 * Cmid * HW * 4))
    nb = min(nb, max_nb_vmem, N)
    if N >= 2:
        nb = min(nb, N // 2)                                  # keep >=2 grid steps
    nb = max(nb, 1)
    while N % nb:                                             # must divide N
        nb -= 1
    return nb


def _mbconv_kernel(x_ref, wpw_ref, t1_ref, wdw_ref, t2_ref, wpwl_ref, t3_ref,
                   o_ref, *, H, W, HW, has_residual):
    """NB images per grid step, channel-major layout (C, NB*HW).

    Lanes carry the merged batch*spatial dim (lane-dense loads/stores/rolls),
    sublanes carry channels.  BN scales are pre-folded into the conv weights,
    so each stage is matmul / mul-add + per-channel shift + ReLU.
    """
    L = x_ref.shape[1]                                       # NB * HW lanes
    x = x_ref[...]                                           # (Cin, L) bf16

    # ---- conv_pw (1x1 expansion): single MXU matmul, bf16 operands, f32 acc.
    y = jnp.dot(wpw_ref[...], x, preferred_element_type=jnp.float32)  # (Cmid, L)
    y = jnp.maximum(y + t1_ref[...], 0.0)                    # BN1 shift + ReLU

    # ---- conv_dw (3x3 depthwise, stride 1, pad 1), fully in registers.
    # Spatial sits on the lane axis, so +-1 pixel taps are lane rotations of
    # the merged N*HW axis; taps outside the image (including taps that would
    # wrap into a neighbouring image) are zeroed by (1, L) edge masks.
    j = lax.broadcasted_iota(jnp.int32, (1, L), 1) % HW      # per-image flat idx
    w_of_j = j % W
    keep_xp = (w_of_j != (W - 1)).astype(jnp.float32)        # tap at w+1 valid
    keep_xm = (w_of_j != 0).astype(jnp.float32)              # tap at w-1 valid
    keep_yp = (j < (H - 1) * W).astype(jnp.float32)          # tap at h+1 valid
    keep_ym = (j >= W).astype(jnp.float32)                   # tap at h-1 valid

    a0 = y
    ap = pltpu.roll(y, L - 1, axis=1) * keep_xp              # y[:, j+1]
    am = pltpu.roll(y, 1, axis=1) * keep_xm                  # y[:, j-1]

    wdw = wdw_ref[...]                                       # (Cmid, 9), s2 folded

    def row_comb(ky):
        # Weighted sum over kx for kernel row ky (kx=0 -> w-1, 1 -> w, 2 -> w+1).
        return (am * wdw[:, 3 * ky + 0:3 * ky + 1] +
                a0 * wdw[:, 3 * ky + 1:3 * ky + 2] +
                ap * wdw[:, 3 * ky + 2:3 * ky + 3])

    acc = row_comb(1)                                                    # row h
    acc = acc + pltpu.roll(row_comb(0), W, axis=1) * keep_ym             # row h-1
    acc = acc + pltpu.roll(row_comb(2), L - W, axis=1) * keep_yp         # row h+1
    acc = jnp.maximum(acc + t2_ref[...], 0.0)                # BN2 shift + ReLU (SE=Identity)

    # ---- conv_pwl (1x1 projection) + BN3 shift: single MXU matmul.
    z = jnp.dot(wpwl_ref[...], acc.astype(jnp.bfloat16),
                preferred_element_type=jnp.float32)          # (Cout, L)
    z = z + t3_ref[...]

    if has_residual:                                         # in_chs == out_chs, stride 1
        z = z + x.astype(jnp.float32)                        # single upcast for residual
    o_ref[...] = z.astype(o_ref.dtype)


def inverted_residual_forward(x_nchw, kp, nb=None):
    """x_nchw: (N, Cin, H, W) float32 (PyTorch layout).  Returns (N, Cout, H, W)."""
    N, Cin, H, W = x_nchw.shape
    HW = H * W
    Cmid = kp['w_pw'].shape[0]
    Cout = kp['w_pwl'].shape[0]

    nb = nb or _choose_nb(N, HW, Cmid)
    assert N % nb == 0
    L = nb * HW
    # Lane-dense blocks (unmasked vst, relayout-free rolls) require a
    # 128-aligned lane extent unless the block spans the full array.
    assert (L % 128 == 0) or (nb == N), (
        "NB*HW must be a multiple of 128")  # TODO(synk): pad HW for e.g. 14x14

    # Merge batch onto the lane axis: (N, Cin, H, W) -> (Cin, N*HW).  The one
    # transpose happens in XLA outside the kernel; bf16 at the boundary halves
    # input DMA bytes and removes the per-step in-kernel pack.
    x = jnp.transpose(x_nchw, (1, 0, 2, 3)).reshape(Cin, N * HW).astype(jnp.bfloat16)

    kernel = functools.partial(_mbconv_kernel, H=H, W=W, HW=HW,
                               has_residual=(Cin == Cout))

    flops = 2 * N * HW * (Cin * Cmid + Cmid * Cout) + 2 * 9 * N * Cmid * HW
    bytes_accessed = (N * Cin * HW * 2 + N * Cout * HW * 4
                      + Cmid * Cin * 2 + Cout * Cmid * 2 + Cmid * 9 * 4
                      + (Cmid + Cmid + Cout) * 4)

    out = pl.pallas_call(
        kernel,
        out_shape=jax.ShapeDtypeStruct((Cout, N * HW), jnp.float32),
        grid_spec=pltpu.PrefetchScalarGridSpec(
            num_scalar_prefetch=0,
            grid=(N // nb,),
            in_specs=[
                pl.BlockSpec((Cin, L), lambda i: (0, i)),
                pl.BlockSpec((Cmid, Cin), lambda i: (0, 0)),
                pl.BlockSpec((Cmid, 1), lambda i: (0, 0)),
                pl.BlockSpec((Cmid, 9), lambda i: (0, 0)),
                pl.BlockSpec((Cmid, 1), lambda i: (0, 0)),
                pl.BlockSpec((Cout, Cmid), lambda i: (0, 0)),
                pl.BlockSpec((Cout, 1), lambda i: (0, 0)),
            ],
            out_specs=pl.BlockSpec((Cout, L), lambda i: (0, i)),
        ),
        compiler_params=pltpu.CompilerParams(
            dimension_semantics=("parallel",)),
        cost_estimate=pl.CostEstimate(flops=flops, transcendentals=0,
                                      bytes_accessed=bytes_accessed),
    )(x, kp['w_pw'], kp['t1'], kp['w_dw'], kp['t2'], kp['w_pwl'], kp['t3'])

    # (Cout, N*HW) -> (N, Cout, H, W)
    return jnp.transpose(out.reshape(Cout, N, H, W), (1, 0, 2, 3))


# ----------------------------- parameter setup -----------------------------

def init_params(key, in_chs, out_chs, exp_ratio=4.0, dw_kernel_size=3):
    """Deterministic synthetic parameters, PyTorch layouts (OIHW convs)."""
    mid_chs = make_divisible(in_chs * exp_ratio)
    ks = jax.random.split(key, 20)

    def rnorm(k, shape, scale=0.1):
        return scale * jax.random.normal(k, shape, jnp.float32)

    p = {'mid_chs': mid_chs}
    p['conv_pw_w'] = rnorm(ks[0], (mid_chs, in_chs, 1, 1))
    p['conv_pw_b'] = rnorm(ks[1], (mid_chs,))
    p['conv_dw_w'] = rnorm(ks[2], (mid_chs, 1, dw_kernel_size, dw_kernel_size))
    p['conv_dw_b'] = rnorm(ks[3], (mid_chs,))
    p['conv_pwl_w'] = rnorm(ks[4], (out_chs, mid_chs, 1, 1))
    p['conv_pwl_b'] = rnorm(ks[5], (out_chs,))
    for i, c, ka in ((1, mid_chs, 6), (2, mid_chs, 10), (3, out_chs, 14)):
        p[f'bn{i}_gamma'] = 1.0 + rnorm(ks[ka], (c,))
        p[f'bn{i}_beta'] = rnorm(ks[ka + 1], (c,))
        p[f'bn{i}_mean'] = rnorm(ks[ka + 2], (c,))
        p[f'bn{i}_var'] = 0.5 + jax.random.uniform(ks[ka + 3], (c,), jnp.float32)
    return p


def fold_params(p):
    """Fold conv biases + eval-mode BN (scale AND shift) into the weights.

    The BN scale s is multiplied into the conv weights (per output channel),
    so the kernel only applies '+ t' after each conv.  Pointwise weights are
    stored bf16 (MXU operands); depthwise weights stay f32 (VPU math).
    """
    def fold(i, conv_bias):
        s = p[f'bn{i}_gamma'] / jnp.sqrt(p[f'bn{i}_var'] + BN_EPS)
        t = p[f'bn{i}_beta'] - p[f'bn{i}_mean'] * s + conv_bias * s
        return s, t

    s1, t1 = fold(1, p['conv_pw_b'])
    s2, t2 = fold(2, p['conv_dw_b'])
    s3, t3 = fold(3, p['conv_pwl_b'])

    mid = p['conv_dw_w'].shape[0]
    w_pw = p['conv_pw_w'][:, :, 0, 0] * s1[:, None]                 # (Cmid, Cin)
    w_dw = p['conv_dw_w'][:, 0].reshape(mid, 9) * s2[:, None]       # (Cmid, 9)
    w_pwl = p['conv_pwl_w'][:, :, 0, 0] * s3[:, None]               # (Cout, Cmid)

    return {
        'w_pw': w_pw.astype(jnp.bfloat16),
        'w_dw': w_dw.astype(jnp.float32),
        'w_pwl': w_pwl.astype(jnp.bfloat16),
        't1': t1.reshape(-1, 1).astype(jnp.float32),
        't2': t2.reshape(-1, 1).astype(jnp.float32),
        't3': t3.reshape(-1, 1).astype(jnp.float32),
    }


# --------------------------- pure-JAX reference -----------------------------

def ref_forward(x_nchw, p):
    x = jnp.transpose(x_nchw, (0, 2, 3, 1))
    dn = ('NHWC', 'HWIO', 'NHWC')

    def bn(y, i):
        return ((y - p[f'bn{i}_mean']) / jnp.sqrt(p[f'bn{i}_var'] + BN_EPS)
                * p[f'bn{i}_gamma'] + p[f'bn{i}_beta'])

    w_pw = jnp.transpose(p['conv_pw_w'], (2, 3, 1, 0))
    w_dw = jnp.transpose(p['conv_dw_w'], (2, 3, 1, 0))
    w_pwl = jnp.transpose(p['conv_pwl_w'], (2, 3, 1, 0))
    mid = p['mid_chs']

    shortcut = x
    y = lax.conv_general_dilated(x, w_pw, (1, 1), 'VALID',
                                 dimension_numbers=dn) + p['conv_pw_b']
    y = jnp.maximum(bn(y, 1), 0.0)
    y = lax.conv_general_dilated(y, w_dw, (1, 1), ((1, 1), (1, 1)),
                                 dimension_numbers=dn,
                                 feature_group_count=mid) + p['conv_dw_b']
    y = jnp.maximum(bn(y, 2), 0.0)
    y = lax.conv_general_dilated(y, w_pwl, (1, 1), 'VALID',
                                 dimension_numbers=dn) + p['conv_pwl_b']
    y = bn(y, 3) + shortcut
    return jnp.transpose(y, (0, 3, 1, 2))


if __name__ == "__main__":
    # out_chs == in_chs and stride == 1 -> residual path active.
    N, Cin, H, W = 4, 8, 16, 16
    key = jax.random.PRNGKey(0)
    k_p, k_x = jax.random.split(key)

    raw_params = init_params(k_p, in_chs=Cin, out_chs=Cin, exp_ratio=4.0)
    kernel_params = fold_params(raw_params)

    x = jax.random.normal(k_x, (N, Cin, H, W), jnp.float32)

    out = inverted_residual_forward(x, kernel_params)
    out = jax.block_until_ready(out)

    ref = ref_forward(x, raw_params)
    assert out.shape == (N, Cin, H, W)
    err = float(jnp.max(jnp.abs(out - ref)))
    scale = float(jnp.max(jnp.abs(ref))) + 1e-6
    # bf16 activations / matmul operands (f32 accumulation) -> relaxed
    # tolerance vs the f32 reference.
    if err > 3e-2 and err / scale > 3e-2:
        raise AssertionError(f"mismatch vs reference: max abs err = {err}")
    print("KERNEL_OK")
</pallas_src>

<mosaic_0001>
module attributes {stable_mosaic.version = 11 : i64} {
  func.func @_mbconv_kernel(%arg0: i32, %arg1: memref<8x512xbf16, #tpu.memory_space<vmem>>, %arg2: memref<32x8xbf16, #tpu.memory_space<vmem>>, %arg3: memref<32x1xf32, #tpu.memory_space<vmem>>, %arg4: memref<32x9xf32, #tpu.memory_space<vmem>>, %arg5: memref<32x1xf32, #tpu.memory_space<vmem>>, %arg6: memref<8x32xbf16, #tpu.memory_space<vmem>>, %arg7: memref<8x1xf32, #tpu.memory_space<vmem>>, %arg8: memref<8x512xf32, #tpu.memory_space<vmem>>) attributes {dimension_semantics = [#tpu.dimension_semantics<parallel>], iteration_bounds = array<i64: 2>, scalar_prefetch = 0 : i64, scratch_operands = 0 : i64, tpu.core_type = #tpu.core_type<tc>, window_params = [{transform_indices = @transform_0, window_bounds = array<i64: 8, 512>}, {pipeline_mode = #tpu.pipeline_mode<synchronous>, transform_indices = @transform_1, window_bounds = array<i64: 32, 8>}, {pipeline_mode = #tpu.pipeline_mode<synchronous>, transform_indices = @transform_2, window_bounds = array<i64: 32, 1>}, {pipeline_mode = #tpu.pipeline_mode<synchronous>, transform_indices = @transform_3, window_bounds = array<i64: 32, 9>}, {pipeline_mode = #tpu.pipeline_mode<synchronous>, transform_indices = @transform_4, window_bounds = array<i64: 32, 1>}, {pipeline_mode = #tpu.pipeline_mode<synchronous>, transform_indices = @transform_5, window_bounds = array<i64: 8, 32>}, {pipeline_mode = #tpu.pipeline_mode<synchronous>, transform_indices = @transform_6, window_bounds = array<i64: 8, 1>}, {transform_indices = @transform_7, window_bounds = array<i64: 8, 512>}]} {
    %c0 = arith.constant 0 : index
    %c0_0 = arith.constant 0 : index
    %0 = vector.load %arg1[%c0, %c0_0] : memref<8x512xbf16, #tpu.memory_space<vmem>>, vector<8x512xbf16>
    %c0_1 = arith.constant 0 : index
    %c0_2 = arith.constant 0 : index
    %1 = vector.load %arg2[%c0_1, %c0_2] : memref<32x8xbf16, #tpu.memory_space<vmem>>, vector<32x8xbf16>
    %cst = arith.constant dense<0.000000e+00> : vector<32x512xf32>
    %2 = tpu.matmul %1, %0, %cst {dimension_numbers = #tpu.dot_dimension_numbers<[1], [0], [0], [1], [0, 0, 1, 1], [], []>} : vector<32x8xbf16>, vector<8x512xbf16>, vector<32x512xf32> -> vector<32x512xf32>
    %c0_3 = arith.constant 0 : index
    %c0_4 = arith.constant 0 : index
    %3 = vector.load %arg3[%c0_3, %c0_4] : memref<32x1xf32, #tpu.memory_space<vmem>>, vector<32x1xf32>
    %4 = vector.broadcast %3 : vector<32x1xf32> to vector<32x512xf32>
    %5 = arith.addf %2, %4 : vector<32x512xf32>
    %cst_5 = arith.constant 0.000000e+00 : f32
    %6 = vector.broadcast %cst_5 : f32 to vector<32x512xf32>
    %7 = arith.maximumf %5, %6 : vector<32x512xf32>
    %8 = tpu.iota {dimensions = array<i32: 1>} : vector<1x512xi32>
    %c256_i32 = arith.constant 256 : i32
    %c0_i32 = arith.constant 0 : i32
    %9 = arith.cmpi eq, %c256_i32, %c0_i32 : i32
    %c1_i32 = arith.constant 1 : i32
    %10 = arith.select %9, %c1_i32, %c256_i32 : i32
    %11 = vector.broadcast %10 : i32 to vector<1x512xi32>
    %12 = arith.remsi %8, %11 : vector<1x512xi32>
    %c0_i32_6 = arith.constant 0 : i32
    %13 = vector.broadcast %c0_i32_6 : i32 to vector<1x512xi32>
    %14 = arith.cmpi ne, %12, %13 : vector<1x512xi32>
    %c0_i32_7 = arith.constant 0 : i32
    %15 = vector.broadcast %c0_i32_7 : i32 to vector<1x512xi32>
    %16 = arith.cmpi slt, %12, %15 : vector<1x512xi32>
    %c0_i32_8 = arith.constant 0 : i32
    %17 = arith.cmpi slt, %10, %c0_i32_8 : i32
    %18 = vector.broadcast %17 : i1 to vector<1x512xi1>
    %19 = vector.broadcast %18 : vector<1x512xi1> to vector<1x512xi1>
    %20 = arith.xori %16, %19 : vector<1x512xi1>
    %21 = arith.andi %20, %14 : vector<1x512xi1>
    %22 = vector.broadcast %10 : i32 to vector<1x512xi32>
    %23 = arith.addi %12, %22 : vector<1x512xi32>
    %24 = arith.select %21, %23, %12 : vector<1x512xi1>, vector<1x512xi32>
    %c16_i32 = arith.constant 16 : i32
    %c0_i32_9 = arith.constant 0 : i32
    %25 = arith.cmpi eq, %c16_i32, %c0_i32_9 : i32
    %c1_i32_10 = arith.constant 1 : i32
    %26 = arith.select %25, %c1_i32_10, %c16_i32 : i32
    %27 = vector.broadcast %26 : i32 to vector<1x512xi32>
    %28 = arith.remsi %24, %27 : vector<1x512xi32>
    %c0_i32_11 = arith.constant 0 : i32
    %29 = vector.broadcast %c0_i32_11 : i32 to vector<1x512xi32>
    %30 = arith.cmpi ne, %28, %29 : vector<1x512xi32>
    %c0_i32_12 = arith.constant 0 : i32
    %31 = vector.broadcast %c0_i32_12 : i32 to vector<1x512xi32>
    %32 = arith.cmpi slt, %28, %31 : vector<1x512xi32>
    %c0_i32_13 = arith.constant 0 : i32
    %33 = arith.cmpi slt, %26, %c0_i32_13 : i32
    %34 = vector.broadcast %33 : i1 to vector<1x512xi1>
    %35 = vector.broadcast %34 : vector<1x512xi1> to vector<1x512xi1>
    %36 = arith.xori %32, %35 : vector<1x512xi1>
    %37 = arith.andi %36, %30 : vector<1x512xi1>
    %38 = vector.broadcast %26 : i32 to vector<1x512xi32>
    %39 = arith.addi %28, %38 : vector<1x512xi32>
    %40 = arith.select %37, %39, %28 : vector<1x512xi1>, vector<1x512xi32>
    %c15_i32 = arith.constant 15 : i32
    %41 = vector.broadcast %c15_i32 : i32 to vector<1x512xi32>
    %42 = arith.cmpi ne, %40, %41 : vector<1x512xi32>
    %43 = arith.extui %42 : vector<1x512xi1> to vector<1x512xi32>
    %44 = arith.sitofp %43 : vector<1x512xi32> to vector<1x512xf32>
    %c0_i32_14 = arith.constant 0 : i32
    %45 = vector.broadcast %c0_i32_14 : i32 to vector<1x512xi32>
    %46 = arith.cmpi ne, %40, %45 : vector<1x512xi32>
    %47 = arith.extui %46 : vector<1x512xi1> to vector<1x512xi32>
    %48 = arith.sitofp %47 : vector<1x512xi32> to vector<1x512xf32>
    %c240_i32 = arith.constant 240 : i32
    %49 = vector.broadcast %c240_i32 : i32 to vector<1x512xi32>
    %50 = arith.cmpi slt, %24, %49 : vector<1x512xi32>
    %51 = arith.extui %50 : vector<1x512xi1> to vector<1x512xi32>
    %52 = arith.sitofp %51 : vector<1x512xi32> to vector<1x512xf32>
    %c16_i32_15 = arith.constant 16 : i32
    %53 = vector.broadcast %c16_i32_15 : i32 to vector<1x512xi32>
    %54 = arith.cmpi sge, %24, %53 : vector<1x512xi32>
    %55 = arith.extui %54 : vector<1x512xi1> to vector<1x512xi32>
    %56 = arith.sitofp %55 : vector<1x512xi32> to vector<1x512xf32>
    %c511_i32 = arith.constant 511 : i32
    %57 = tpu.dynamic_rotate %7 by %c511_i32 dim 1 : vector<32x512xf32>, i32 -> vector<32x512xf32>
    %58 = vector.broadcast %44 : vector<1x512xf32> to vector<32x512xf32>
    %59 = arith.mulf %57, %58 : vector<32x512xf32>
    %c1_i32_16 = arith.constant 1 : i32
    %60 = tpu.dynamic_rotate %7 by %c1_i32_16 dim 1 : vector<32x512xf32>, i32 -> vector<32x512xf32>
    %61 = vector.broadcast %48 : vector<1x512xf32> to vector<32x512xf32>
    %62 = arith.mulf %60, %61 : vector<32x512xf32>
    %c0_17 = arith.constant 0 : index
    %c0_18 = arith.constant 0 : index
    %63 = vector.load %arg4[%c0_17, %c0_18] : memref<32x9xf32, #tpu.memory_space<vmem>>, vector<32x9xf32>
    %64 = vector.extract_strided_slice %63 {offsets = [0, 3], sizes = [32, 1], strides = [1, 1]} : vector<32x9xf32> to vector<32x1xf32>
    %65 = vector.broadcast %64 : vector<32x1xf32> to vector<32x512xf32>
    %66 = arith.mulf %62, %65 : vector<32x512xf32>
    %67 = vector.extract_strided_slice %63 {offsets = [0, 4], sizes = [32, 1], strides = [1, 1]} : vector<32x9xf32> to vector<32x1xf32>
    %68 = vector.broadcast %67 : vector<32x1xf32> to vector<32x512xf32>
    %69 = arith.mulf %7, %68 : vector<32x512xf32>
    %70 = arith.addf %66, %69 : vector<32x512xf32>
    %71 = vector.extract_strided_slice %63 {offsets = [0, 5], sizes = [32, 1], strides = [1, 1]} : vector<32x9xf32> to vector<32x1xf32>
    %72 = vector.broadcast %71 : vector<32x1xf32> to vector<32x512xf32>
    %73 = arith.mulf %59, %72 : vector<32x512xf32>
    %74 = arith.addf %70, %73 : vector<32x512xf32>
    %75 = vector.extract_strided_slice %63 {offsets = [0, 0], sizes = [32, 1], strides = [1, 1]} : vector<32x9xf32> to vector<32x1xf32>
    %76 = vector.broadcast %75 : vector<32x1xf32> to vector<32x512xf32>
    %77 = arith.mulf %62, %76 : vector<32x512xf32>
    %78 = vector.extract_strided_slice %63 {offsets = [0, 1], sizes = [32, 1], strides = [1, 1]} : vector<32x9xf32> to vector<32x1xf32>
    %79 = vector.broadcast %78 : vector<32x1xf32> to vector<32x512xf32>
    %80 = arith.mulf %7, %79 : vector<32x512xf32>
    %81 = arith.addf %77, %80 : vector<32x512xf32>
    %82 = vector.extract_strided_slice %63 {offsets = [0, 2], sizes = [32, 1], strides = [1, 1]} : vector<32x9xf32> to vector<32x1xf32>
    %83 = vector.broadcast %82 : vector<32x1xf32> to vector<32x512xf32>
    %84 = arith.mulf %59, %83 : vector<32x512xf32>
    %85 = arith.addf %81, %84 : vector<32x512xf32>
    %c16_i32_19 = arith.constant 16 : i32
    %86 = tpu.dynamic_rotate %85 by %c16_i32_19 dim 1 : vector<32x512xf32>, i32 -> vector<32x512xf32>
    %87 = vector.broadcast %56 : vector<1x512xf32> to vector<32x512xf32>
    %88 = arith.mulf %86, %87 : vector<32x512xf32>
    %89 = arith.addf %74, %88 : vector<32x512xf32>
    %90 = vector.extract_strided_slice %63 {offsets = [0, 6], sizes = [32, 1], strides = [1, 1]} : vector<32x9xf32> to vector<32x1xf32>
    %91 = vector.broadcast %90 : vector<32x1xf32> to vector<32x512xf32>
    %92 = arith.mulf %62, %91 : vector<32x512xf32>
    %93 = vector.extract_strided_slice %63 {offsets = [0, 7], sizes = [32, 1], strides = [1, 1]} : vector<32x9xf32> to vector<32x1xf32>
    %94 = vector.broadcast %93 : vector<32x1xf32> to vector<32x512xf32>
    %95 = arith.mulf %7, %94 : vector<32x512xf32>
    %96 = arith.addf %92, %95 : vector<32x512xf32>
    %97 = vector.extract_strided_slice %63 {offsets = [0, 8], sizes = [32, 1], strides = [1, 1]} : vector<32x9xf32> to vector<32x1xf32>
    %98 = vector.broadcast %97 : vector<32x1xf32> to vector<32x512xf32>
    %99 = arith.mulf %59, %98 : vector<32x512xf32>
    %100 = arith.addf %96, %99 : vector<32x512xf32>
    %c496_i32 = arith.constant 496 : i32
    %101 = tpu.dynamic_rotate %100 by %c496_i32 dim 1 : vector<32x512xf32>, i32 -> vector<32x512xf32>
    %102 = vector.broadcast %52 : vector<1x512xf32> to vector<32x512xf32>
    %103 = arith.mulf %101, %102 : vector<32x512xf32>
    %104 = arith.addf %89, %103 : vector<32x512xf32>
    %c0_20 = arith.constant 0 : index
    %c0_21 = arith.constant 0 : index
    %105 = vector.load %arg5[%c0_20, %c0_21] : memref<32x1xf32, #tpu.memory_space<vmem>>, vector<32x1xf32>
    %106 = vector.broadcast %105 : vector<32x1xf32> to vector<32x512xf32>
    %107 = arith.addf %104, %106 : vector<32x512xf32>
    %cst_22 = arith.constant 0.000000e+00 : f32
    %108 = vector.broadcast %cst_22 : f32 to vector<32x512xf32>
    %109 = arith.maximumf %107, %108 : vector<32x512xf32>
    %c0_23 = arith.constant 0 : index
    %c0_24 = arith.constant 0 : index
    %110 = vector.load %arg6[%c0_23, %c0_24] : memref<8x32xbf16, #tpu.memory_space<vmem>>, vector<8x32xbf16>
    %111 = arith.truncf %109 : vector<32x512xf32> to vector<32x512xbf16>
    %cst_25 = arith.constant dense<0.000000e+00> : vector<8x512xf32>
    %112 = tpu.matmul %110, %111, %cst_25 {dimension_numbers = #tpu.dot_dimension_numbers<[1], [0], [0], [1], [0, 0, 1, 1], [], []>} : vector<8x32xbf16>, vector<32x512xbf16>, vector<8x512xf32> -> vector<8x512xf32>
    %c0_26 = arith.constant 0 : index
    %c0_27 = arith.constant 0 : index
    %113 = vector.load %arg7[%c0_26, %c0_27] : memref<8x1xf32, #tpu.memory_space<vmem>>, vector<8x1xf32>
    %114 = vector.broadcast %113 : vector<8x1xf32> to vector<8x512xf32>
    %115 = arith.addf %112, %114 : vector<8x512xf32>
    %116 = arith.extf %0 : vector<8x512xbf16> to vector<8x512xf32>
    %117 = arith.addf %115, %116 : vector<8x512xf32>
    %c0_28 = arith.constant 0 : index
    %c0_29 = arith.constant 0 : index
    %118 = vector.load %arg8[%c0_28, %c0_29] : memref<8x512xf32, #tpu.memory_space<vmem>>, vector<8x512xf32>
    tpu.vector_store %arg8[%c0_28, %c0_29], %117 {strides = array<i32>} : memref<8x512xf32, #tpu.memory_space<vmem>>, vector<8x512xf32>,
    return
  }
  func.func @transform_0(%arg0: i32) -> (i32, i32) {
    %c0_i32 = arith.constant 0 : i32
    %c0_i32_0 = arith.constant 0 : i32
    return %c0_i32, %arg0 : i32, i32
  }
  func.func @transform_1(%arg0: i32) -> (i32, i32) {
    %c0_i32 = arith.constant 0 : i32
    %c0_i32_0 = arith.constant 0 : i32
    %c0_i32_1 = arith.constant 0 : i32
    return %c0_i32, %c0_i32_0 : i32, i32
  }
  func.func @transform_2(%arg0: i32) -> (i32, i32) {
    %c0_i32 = arith.constant 0 : i32
    %c0_i32_0 = arith.constant 0 : i32
    %c0_i32_1 = arith.constant 0 : i32
    return %c0_i32, %c0_i32_0 : i32, i32
  }
  func.func @transform_3(%arg0: i32) -> (i32, i32) {
    %c0_i32 = arith.constant 0 : i32
    %c0_i32_0 = arith.constant 0 : i32
    %c0_i32_1 = arith.constant 0 : i32
    return %c0_i32, %c0_i32_0 : i32, i32
  }
  func.func @transform_4(%arg0: i32) -> (i32, i32) {
    %c0_i32 = arith.constant 0 : i32
    %c0_i32_0 = arith.constant 0 : i32
    %c0_i32_1 = arith.constant 0 : i32
    return %c0_i32, %c0_i32_0 : i32, i32
  }
  func.func @transform_5(%arg0: i32) -> (i32, i32) {
    %c0_i32 = arith.constant 0 : i32
    %c0_i32_0 = arith.constant 0 : i32
    %c0_i32_1 = arith.constant 0 : i32
    return %c0_i32, %c0_i32_0 : i32, i32
  }
  func.func @transform_6(%arg0: i32) -> (i32, i32) {
    %c0_i32 = arith.constant 0 : i32
    %c0_i32_0 = arith.constant 0 : i32
    %c0_i32_1 = arith.constant 0 : i32
    return %c0_i32, %c0_i32_0 : i32, i32
  }
  func.func @transform_7(%arg0: i32) -> (i32, i32) {
    %c0_i32 = arith.constant 0 : i32
    %c0_i32_0 = arith.constant 0 : i32
    return %c0_i32, %arg0 : i32, i32
  }
}

</mosaic_0001>

<llo_original>
// kernel: tpu_custom_call.1
$region0: #{tpu_custom_call.1}
  #allocation0 [shape = 'u32[]', space=smem, size = 0x4, offset = 0x4, fixed_abs, tag = 'smem constant byte address 0x4 - core index']
  #allocation1 [shape = 'u32[72,128]{1,0:T(1,128)}', space=vmem, size = 0x9000, scoped, tag = 'internal scratch']
  %s0 = inlined_call_operand.vmem [shape: bf16[8,1024], index: 0, kind: input, shape index: {}]
  %s1 = inlined_call_operand.vmem [shape: bf16[32,8], index: 1, kind: input, shape index: {}]
  %s2 = inlined_call_operand.vmem [shape: f32[32,1], index: 2, kind: input, shape index: {}]
  %s3 = inlined_call_operand.vmem [shape: f32[32,9], index: 3, kind: input, shape index: {}]
  %s4 = inlined_call_operand.vmem [shape: f32[32,1], index: 4, kind: input, shape index: {}]
  %s5 = inlined_call_operand.vmem [shape: bf16[8,32], index: 5, kind: input, shape index: {}]
  %s6 = inlined_call_operand.vmem [shape: f32[8,1], index: 6, kind: input, shape index: {}]
  %s7 = inlined_call_operand.hbm [shape: f32[8,1024], index: 7, kind: output, shape index: {}]
  %s8 = sld [smem:[#allocation0]]
  $region61: #{tpu_custom_call.1} parent=0
    _
  %s10 = ssub.s32 1, %s8
  %s11 = scalar_select 0, %s10, %s8
  $region1: #{tpu_custom_call.1} parent=0
    #allocation2 [shape = 'u8[32768]{0}', space=vmem, size = 0x8000, scoped, tag = 'output window, operand 0']
    #allocation3 [shape = 's32[2]{0}', space=sflag, size = 0x8, scoped, tag = 'scoped memory for tpu_custom_call.1']
    %12 = vsyncpa [#allocation3], 0
    %s13 = scalar_lea.sflag [#allocation3], 1
    %14 = vsyncpa %s13, 0
    loop: start=0, step=1, limit=4
    $region2: #{tpu_custom_call.1} parent=1 // loop_pre_header
      _
    $region3: #{tpu_custom_call.1} parent=1 // loop_header
      %s16 = sphi 0, %s20
      %p17 = scmp.ge.s32.totalorder %s16, 4
      %s26 = sphi 0, %s28
      %s29 = sphi 0, %s26
      %s30 = sphi 0, %s29
      %s46 = sphi 0, %s30
      %s50 = sphi 0, %s50
      %s52 = sphi 0, %s50
      %s53 = sphi 0, %s52
      %s67 = sphi 0, %s53
      %s71 = sphi 0, %s71
      %s73 = sphi 0, %s71
      %s74 = sphi 0, %s73
      %s88 = sphi 0, %s74
      %s92 = sphi 0, %s92
      %s94 = sphi 0, %s92
      %s95 = sphi 0, %s94
      %s109 = sphi 0, %s95
      %s113 = sphi 0, %s113
      %s115 = sphi 0, %s113
      %s116 = sphi 0, %s115
      %s130 = sphi 0, %s116
      %s134 = sphi 0, %s134
      %s136 = sphi 0, %s134
      %s137 = sphi 0, %s136
      %s151 = sphi 0, %s137
      %s155 = sphi 0, %s155
      %s157 = sphi 0, %s155
      %s158 = sphi 0, %s157
      %s172 = sphi 0, %s158
      %s178 = sphi 0, %s180
      %s181 = sphi 0, %s178
      %s182 = sphi 0, %s181
      %s198 = sphi 0, %s182
    $region4: #{tpu_custom_call.1} parent=1 // loop_header_branch
      %19 = sbr.rel (%p17) target = $region8
    $region5: #{tpu_custom_call.1} parent=1 // loop_body
      %s21 = ssub.s32 %s16, 1
      %s22 = ssub.s32 %s16, 2
      %s23 = sadd.s32 %s16, 1
      %s24 = ssub.s32 %s16, %s23
      %p25 = scmp.eq.s32.totalorder %s24, 0
      %s27 = sadd.s32 %s26, 1
      %s28 = scalar_select %p25, %s26, %s27
      %p31 = pneg %p25
      %p32 = scmp.eq.s32.totalorder %s16, 1
      %p33 = por %p31, %p32
      %p34 = scmp.ne.s32.totalorder %s26, %s29
      %p35 = scmp.eq.s32.totalorder %s16, 0
      %p36 = por %p34, %p35
      %p37 = scmp.ne.s32.totalorder %s26, %s29
      %p38 = scmp.eq.s32.totalorder %s21, 1
      %p39 = por %p37, %p38
      %p40 = scmp.ne.s32.totalorder %s29, %s30
      %p41 = scmp.eq.s32.totalorder %s21, 0
      %p42 = por %p40, %p41
      %p43 = scmp.ne.s32.totalorder %s29, %s30
      %p44 = scmp.eq.s32.totalorder %s22, 1
      %p45 = por %p43, %p44
      %p47 = scmp.ne.s32.totalorder %s30, %s46
      %p48 = scmp.eq.s32.totalorder %s22, 0
      %p49 = por %p47, %p48
      %s51 = sadd.s32 %s50, 1
      %p54 = scmp.eq.s32.totalorder %s16, 1
      %p55 = scmp.ne.s32.totalorder %s50, %s52
      %p56 = scmp.eq.s32.totalorder %s16, 0
      %p57 = por %p55, %p56
      %p58 = scmp.ne.s32.totalorder %s50, %s52
      %p59 = scmp.eq.s32.totalorder %s21, 1
      %p60 = por %p58, %p59
      %p61 = scmp.ne.s32.totalorder %s52, %s53
      %p62 = scmp.eq.s32.totalorder %s21, 0
      %p63 = por %p61, %p62
      %p64 = scmp.ne.s32.totalorder %s52, %s53
      %p65 = scmp.eq.s32.totalorder %s22, 1
      %p66 = por %p64, %p65
      %p68 = scmp.ne.s32.totalorder %s53, %s67
      %p69 = scmp.eq.s32.totalorder %s22, 0
      %p70 = por %p68, %p69
      %s72 = sadd.s32 %s71, 1
      %p75 = scmp.eq.s32.totalorder %s16, 1
      %p76 = scmp.ne.s32.totalorder %s71, %s73
      %p77 = scmp.eq.s32.totalorder %s16, 0
      %p78 = por %p76, %p77
      %p79 = scmp.ne.s32.totalorder %s71, %s73
      %p80 = scmp.eq.s32.totalorder %s21, 1
      %p81 = por %p79, %p80
      %p82 = scmp.ne.s32.totalorder %s73, %s74
      %p83 = scmp.eq.s32.totalorder %s21, 0
      %p84 = por %p82, %p83
      %p85 = scmp.ne.s32.totalorder %s73, %s74
      %p86 = scmp.eq.s32.totalorder %s22, 1
      %p87 = por %p85, %p86
      %p89 = scmp.ne.s32.totalorder %s74, %s88
      %p90 = scmp.eq.s32.totalorder %s22, 0
      %p91 = por %p89, %p90
      %s93 = sadd.s32 %s92, 1
      %p96 = scmp.eq.s32.totalorder %s16, 1
      %p97 = scmp.ne.s32.totalorder %s92, %s94
      %p98 = scmp.eq.s32.totalorder %s16, 0
      %p99 = por %p97, %p98
      %p100 = scmp.ne.s32.totalorder %s92, %s94
      %p101 = scmp.eq.s32.totalorder %s21, 1
      %p102 = por %p100, %p101
      %p103 = scmp.ne.s32.totalorder %s94, %s95
      %p104 = scmp.eq.s32.totalorder %s21, 0
      %p105 = por %p103, %p104
      %p106 = scmp.ne.s32.totalorder %s94, %s95
      %p107 = scmp.eq.s32.totalorder %s22, 1
      %p108 = por %p106, %p107
      %p110 = scmp.ne.s32.totalorder %s95, %s109
      %p111 = scmp.eq.s32.totalorder %s22, 0
      %p112 = por %p110, %p111
      %s114 = sadd.s32 %s113, 1
      %p117 = scmp.eq.s32.totalorder %s16, 1
      %p118 = scmp.ne.s32.totalorder %s113, %s115
      %p119 = scmp.eq.s32.totalorder %s16, 0
      %p120 = por %p118, %p119
      %p121 = scmp.ne.s32.totalorder %s113, %s115
      %p122 = scmp.eq.s32.totalorder %s21, 1
      %p123 = por %p121, %p122
      %p124 = scmp.ne.s32.totalorder %s115, %s116
      %p125 = scmp.eq.s32.totalorder %s21, 0
      %p126 = por %p124, %p125
      %p127 = scmp.ne.s32.totalorder %s115, %s116
      %p128 = scmp.eq.s32.totalorder %s22, 1
      %p129 = por %p127, %p128
      %p131 = scmp.ne.s32.totalorder %s116, %s130
      %p132 = scmp.eq.s32.totalorder %s22, 0
      %p133 = por %p131, %p132
      %s135 = sadd.s32 %s134, 1
      %p138 = scmp.eq.s32.totalorder %s16, 1
      %p139 = scmp.ne.s32.totalorder %s134, %s136
      %p140 = scmp.eq.s32.totalorder %s16, 0
      %p141 = por %p139, %p140
      %p142 = scmp.ne.s32.totalorder %s134, %s136
      %p143 = scmp.eq.s32.totalorder %s21, 1
      %p144 = por %p142, %p143
      %p145 = scmp.ne.s32.totalorder %s136, %s137
      %p146 = scmp.eq.s32.totalorder %s21, 0
      %p147 = por %p145, %p146
      %p148 = scmp.ne.s32.totalorder %s136, %s137
      %p149 = scmp.eq.s32.totalorder %s22, 1
      %p150 = por %p148, %p149
      %p152 = scmp.ne.s32.totalorder %s137, %s151
      %p153 = scmp.eq.s32.totalorder %s22, 0
      %p154 = por %p152, %p153
      %s156 = sadd.s32 %s155, 1
      %p159 = scmp.eq.s32.totalorder %s16, 1
      %p160 = scmp.ne.s32.totalorder %s155, %s157
      %p161 = scmp.eq.s32.totalorder %s16, 0
      %p162 = por %p160, %p161
      %p163 = scmp.ne.s32.totalorder %s155, %s157
      %p164 = scmp.eq.s32.totalorder %s21, 1
      %p165 = por %p163, %p164
      %p166 = scmp.ne.s32.totalorder %s157, %s158
      %p167 = scmp.eq.s32.totalorder %s21, 0
      %p168 = por %p166, %p167
      %p169 = scmp.ne.s32.totalorder %s157, %s158
      %p170 = scmp.eq.s32.totalorder %s22, 1
      %p171 = por %p169, %p170
      %p173 = scmp.ne.s32.totalorder %s158, %s172
      %p174 = scmp.eq.s32.totalorder %s22, 0
      %p175 = por %p173, %p174
      %s176 = ssub.s32 %s16, %s23
      %p177 = scmp.eq.s32.totalorder %s176, 0
      %s179 = sadd.s32 %s178, 1
      %s180 = scalar_select %p177, %s178, %s179
      %p183 = pneg %p177
      %p184 = scmp.eq.s32.totalorder %s16, 1
      %p185 = por %p183, %p184
      %p186 = scmp.ne.s32.totalorder %s178, %s181
      %p187 = scmp.eq.s32.totalorder %s16, 0
      %p188 = por %p186, %p187
      %p189 = scmp.ne.s32.totalorder %s178, %s181
      %p190 = scmp.eq.s32.totalorder %s21, 1
      %p191 = por %p189, %p190
      %p192 = scmp.ne.s32.totalorder %s181, %s182
      %p193 = scmp.eq.s32.totalorder %s21, 0
      %p194 = por %p192, %p193
      %p195 = scmp.ne.s32.totalorder %s181, %s182
      %p196 = scmp.eq.s32.totalorder %s22, 1
      %p197 = por %p195, %p196
      %p199 = scmp.ne.s32.totalorder %s182, %s198
      %p200 = scmp.eq.s32.totalorder %s22, 0
      %p201 = por %p199, %p200
      %p202 = scmp.le.s32.totalorder 1, %s16
      %p203 = scmp.lt.s32.totalorder %s16, 3
      %p204 = pnand %p202, %p203
      %p205 = pneg %p204
      // Predicated region
      $region9: #{tpu_custom_call.1} parent=5 // pred_check
        _
      $region10: #{tpu_custom_call.1} parent=5 // pred_check_branch
        %207 = sbr.rel (%p204) target = $region12
      $region11: #{tpu_custom_call.1} parent=5 // pred_region
        %s208 = ssub.s32 %s16, 1
        // Predicated region
        $region13: #{tpu_custom_call.1} parent=11 // pred_check
          %p209 = pneg %p63
        $region14: #{tpu_custom_call.1} parent=11 // pred_check_branch
          %211 = sbr.rel (%p209) target = $region16
        $region15: #{tpu_custom_call.1} parent=11 // pred_region
          _
        $region16: #{tpu_custom_call.1} parent=11 // pred_fallthru
          _
        // Predicated region
        $region17: #{tpu_custom_call.1} parent=11 // pred_check
          %p212 = pneg %p84
        $region18: #{tpu_custom_call.1} parent=11 // pred_check_branch
          %214 = sbr.rel (%p212) target = $region20
        $region19: #{tpu_custom_call.1} parent=11 // pred_region
          _
        $region20: #{tpu_custom_call.1} parent=11 // pred_fallthru
          _
        // Predicated region
        $region21: #{tpu_custom_call.1} parent=11 // pred_check
          %p215 = pneg %p105
        $region22: #{tpu_custom_call.1} parent=11 // pred_check_branch
          %217 = sbr.rel (%p215) target = $region24
        $region23: #{tpu_custom_call.1} parent=11 // pred_region
          _
        $region24: #{tpu_custom_call.1} parent=11 // pred_fallthru
          _
        // Predicated region
        $region25: #{tpu_custom_call.1} parent=11 // pred_check
          %p218 = pneg %p126
        $region26: #{tpu_custom_call.1} parent=11 // pred_check_branch
          %220 = sbr.rel (%p218) target = $region28
        $region27: #{tpu_custom_call.1} parent=11 // pred_region
          _
        $region28: #{tpu_custom_call.1} parent=11 // pred_fallthru
          _
        // Predicated region
        $region29: #{tpu_custom_call.1} parent=11 // pred_check
          %p221 = pneg %p147
        $region30: #{tpu_custom_call.1} parent=11 // pred_check_branch
          %223 = sbr.rel (%p221) target = $region32
        $region31: #{tpu_custom_call.1} parent=11 // pred_region
          _
        $region32: #{tpu_custom_call.1} parent=11 // pred_fallthru
          _
        // Predicated region
        $region33: #{tpu_custom_call.1} parent=11 // pred_check
          %p224 = pneg %p168
        $region34: #{tpu_custom_call.1} parent=11 // pred_check_branch
          %226 = sbr.rel (%p224) target = $region36
        $region35: #{tpu_custom_call.1} parent=11 // pred_region
          _
        $region36: #{tpu_custom_call.1} parent=11 // pred_fallthru
          _
      $region12: #{tpu_custom_call.1} parent=5 // pred_fallthru
        _
      %p227 = scmp.lt.s32.totalorder %s16, 2
      // Predicated region
      $region37: #{tpu_custom_call.1} parent=5 // pred_check
        %p228 = pneg %p227
      $region38: #{tpu_custom_call.1} parent=5 // pred_check_branch
        %230 = sbr.rel (%p228) target = $region40
      $region39: #{tpu_custom_call.1} parent=5 // pred_region
        // Predicated region
        $region41: #{tpu_custom_call.1} parent=39 // pred_check
          %p231 = pneg %p36
        $region42: #{tpu_custom_call.1} parent=39 // pred_check_branch
          %233 = sbr.rel (%p231) target = $region44
        $region43: #{tpu_custom_call.1} parent=39 // pred_region
          %s234 = smul.u32 4, %s16
          %p235 = scmp.lt.s32.totalorder %s234, 7
          %s236 = scalar_select %p235, %s234, 7
          %s237 = smul.addr %s236, 4
          %s238 = scalar_lea.vmem %s0, %s237
          %s239 = smul.u32 4, %s16
        $region44: #{tpu_custom_call.1} parent=39 // pred_fallthru
          _
      $region40: #{tpu_custom_call.1} parent=5 // pred_fallthru
        _
      %p240 = scmp.le.s32.totalorder 1, %s16
      %p241 = scmp.lt.s32.totalorder %s16, 3
      %p242 = pnand %p240, %p241
      %p243 = pneg %p242
      // Predicated region
      $region45: #{tpu_custom_call.1} parent=5 // pred_check
        _
      $region46: #{tpu_custom_call.1} parent=5 // pred_check_branch
        %245 = sbr.rel (%p242) target = $region48
      $region47: #{tpu_custom_call.1} parent=5 // pred_region
        %s246 = ssub.s32 %s16, 1
        %s247 = smul.u32 4, %s21
        %p248 = scmp.lt.s32.totalorder %s247, 7
        %s249 = scalar_select %p248, %s247, 7
        %s250 = smul.addr %s249, 4
        %s251 = scalar_lea.vmem %s0, %s250
        %p252 = pneg %p42
        %p253 = pneg %p39
        %p254 = pneg %p63
        %p255 = pneg %p60
        %p256 = pneg %p84
        %p257 = pneg %p81
        %p258 = pneg %p105
        %p259 = pneg %p102
        %p260 = pneg %p126
        %p261 = pneg %p123
        %p262 = pneg %p147
        %p263 = pneg %p144
        %p264 = pneg %p168
        %p265 = pneg %p165
        %p266 = pneg %p194
        %p267 = pneg %p191
        %s268 = sand.u32 %s181, 1
        %s269 = scalar_lea.sflag [#allocation3], %s268
        %s270 = sand.u32 %s181, 1
        %s271 = smul.addr %s270, 32
        %s272 = scalar_lea.vmem [#allocation2], %s271
        %s273 = smul.u32 4, %s21
        %p274 = scmp.lt.s32.totalorder %s273, 7
        %s275 = scalar_select %p274, %s273, 7
        %s276 = smul.addr %s275, 4
        %s277 = scalar_lea.vmem %s0, %s276
        %s278 = smul.u32 4, %s21
        %s279 = smul.u32 4, %s21
        %v281 = vld [vmem:[%s277] sm:$0xff]
        %v282 = vld [vmem:[%s277 + $0x8] sm:$0xff]
        %v283 = vld [vmem:[%s1] sm:$0xf]
        %v284 = vld [vmem:[%s1 + $0x4] sm:$0xf]
        %v285 = vld [vmem:[%s1 + $0x8] sm:$0xf]
        %v286 = vld [vmem:[%s1 + $0xc] sm:$0xf]
        %v287 = vld [vmem:[%s2] sm:$0xff]
        %v288 = vld [vmem:[%s2 + $0x8] sm:$0xff]
        %v289 = vld [vmem:[%s2 + $0x10] sm:$0xff]
        %v290 = vld [vmem:[%s2 + $0x18] sm:$0xff]
        %292 = vset.pattern.permute.xlu0 0
        %293 = vperm.xlu0 %292, %v287
        %v294 = vpop.permute.xlu0 %293
        %297 = vset.pattern.permute.xlu0 0
        %298 = vperm.xlu0 %297, %v288
        %v299 = vpop.permute.xlu0 %298
        %302 = vset.pattern.permute.xlu0 0
        %303 = vperm.xlu0 %302, %v289
        %v304 = vpop.permute.xlu0 %303
        %307 = vset.pattern.permute.xlu0 0
        %308 = vperm.xlu0 %307, %v290
        %v309 = vpop.permute.xlu0 %308
        %v315 = vunpack.c.l.b16 %v283
        %v316 = vunpack.c.l.b16 %v284
        %v317 = vunpack.c.l.b16 %v285
        %v318 = vunpack.c.l.b16 %v286
        %v319 = vpack.c.b16 %v316, %v315
        %v320 = vpack.c.b16 %v318, %v317
        %v323 = vunpack.c.l.b16 %v281
        %v324 = vunpack.c.h.b16 %v281
        %v325 = vunpack.c.l.b16 %v282
        %v326 = vunpack.c.h.b16 %v282
        %v327 = vpack.c.b16 %v323, %v323
        %v328 = vpack.c.b16 %v324, %v324
        %v329 = vpack.c.b16 %v325, %v325
        %v330 = vpack.c.b16 %v326, %v326
        %vm331 = vcmask 64512
        %v333 = vsel %vm331, %v319, 0
        %v336 = vsel %vm331, %v320, 0
        %vm338 = vcmask 1043456
        %v340 = vsel %vm338, %v327, 0
        %v343 = vsel %vm338, %v328, 0
        %v346 = vsel %vm338, %v329, 0
        %v349 = vsel %vm338, %v330, 0
        %351 = vmatpush.bf16.msra.mxu0 0
        %352 = vmatpush.bf16.msra.mxu0 0
        %353 = vmatpush.bf16.msra.mxu0 0
        %354 = vmatpush.bf16.msra.mxu0 0
        %355 = vmatpush.bf16.msra.mxu0 0
        %356 = vmatpush.bf16.msra.mxu0 0
        %357 = vmatpush.bf16.msra.mxu0 0
        %358 = vmatpush.bf16.msra.mxu0 %v340
        %359 = vmatmul.bf16.gmra.mxu0 %v333
        %v360 = vpop.f32.mrf.mxu0
        %v361 = vadd.f32 %v294, %v360
        %v362 = vpop.f32.mrf.mxu0
        %v363 = vadd.f32 %v299, %v362
        %364 = vmatmul.bf16.gmra.mxu0 %v336
        %v365 = vpop.f32.mrf.mxu0
        %v366 = vadd.f32 %v304, %v365
        %v367 = vpop.f32.mrf.mxu0
        %v368 = vadd.f32 %v309, %v367
        %369 = vdwg.mxu0
        %370 = vmatpush.bf16.msra.mxu0 0
        %371 = vmatpush.bf16.msra.mxu0 0
        %372 = vmatpush.bf16.msra.mxu0 0
        %373 = vmatpush.bf16.msra.mxu0 0
        %374 = vmatpush.bf16.msra.mxu0 0
        %375 = vmatpush.bf16.msra.mxu0 0
        %376 = vmatpush.bf16.msra.mxu0 0
        %377 = vmatpush.bf16.msra.mxu0 %v343
        %378 = vmatmul.bf16.gmra.mxu0 %v333
        %v379 = vpop.f32.mrf.mxu0
        %v380 = vadd.f32 %v294, %v379
        %v381 = vpop.f32.mrf.mxu0
        %v382 = vadd.f32 %v299, %v381
        %383 = vmatmul.bf16.gmra.mxu0 %v336
        %v384 = vpop.f32.mrf.mxu0
        %v385 = vadd.f32 %v304, %v384
        %v386 = vpop.f32.mrf.mxu0
        %v387 = vadd.f32 %v309, %v386
        %388 = vdwg.mxu0
        %389 = vmatpush.bf16.msra.mxu0 0
        %390 = vmatpush.bf16.msra.mxu0 0
        %391 = vmatpush.bf16.msra.mxu0 0
        %392 = vmatpush.bf16.msra.mxu0 0
        %393 = vmatpush.bf16.msra.mxu0 0
        %394 = vmatpush.bf16.msra.mxu0 0
        %395 = vmatpush.bf16.msra.mxu0 0
        %396 = vmatpush.bf16.msra.mxu0 %v346
        %397 = vmatmul.bf16.gmra.mxu0 %v333
        %v398 = vpop.f32.mrf.mxu0
        %v399 = vadd.f32 %v294, %v398
        %v400 = vpop.f32.mrf.mxu0
        %v401 = vadd.f32 %v299, %v400
        %402 = vmatmul.bf16.gmra.mxu0 %v336
        %v403 = vpop.f32.mrf.mxu0
        %v404 = vadd.f32 %v304, %v403
        %v405 = vpop.f32.mrf.mxu0
        %v406 = vadd.f32 %v309, %v405
        %407 = vdwg.mxu0
        %408 = vmatpush.bf16.msra.mxu0 0
        %409 = vmatpush.bf16.msra.mxu0 0
        %410 = vmatpush.bf16.msra.mxu0 0
        %411 = vmatpush.bf16.msra.mxu0 0
        %412 = vmatpush.bf16.msra.mxu0 0
        %413 = vmatpush.bf16.msra.mxu0 0
        %414 = vmatpush.bf16.msra.mxu0 0
        %415 = vmatpush.bf16.msra.mxu0 %v349
        %416 = vmatmul.bf16.gmra.mxu0 %v333
        %v417 = vpop.f32.mrf.mxu0
        %v418 = vadd.f32 %v294, %v417
        %v419 = vpop.f32.mrf.mxu0
        %v420 = vadd.f32 %v299, %v419
        %421 = vmatmul.bf16.gmra.mxu0 %v336
        %v422 = vpop.f32.mrf.mxu0
        %v423 = vadd.f32 %v304, %v422
        %v424 = vpop.f32.mrf.mxu0
        %v425 = vadd.f32 %v309, %v424
        %426 = vdwg.mxu0
        %v427 = vmax.f32 %v361, 0.0
        %v428 = vmax.f32 %v380, 0.0
        %v429 = vmax.f32 %v399, 0.0
        %v430 = vmax.f32 %v418, 0.0
        %v431 = vmax.f32 %v363, 0.0
        %v432 = vmax.f32 %v382, 0.0
        %v433 = vmax.f32 %v401, 0.0
        %v434 = vmax.f32 %v420, 0.0
        %v435 = vmax.f32 %v366, 0.0
        %v436 = vmax.f32 %v385, 0.0
        %v437 = vmax.f32 %v404, 0.0
        %v438 = vmax.f32 %v423, 0.0
        %v439 = vmax.f32 %v368, 0.0
        %v440 = vmax.f32 %v387, 0.0
        %v441 = vmax.f32 %v406, 0.0
        %v442 = vmax.f32 %v425, 0.0
        %v443 = vlaneseq
        %v444 = vand.u32 %v443, 127
        %v445 = vadd.s32 %v444, 128
        %v446 = vadd.s32 %v444, 256
        %v447 = vadd.s32 %v444, 384
        %vm448 = vcmp.lt.s32.totalorder %v444, 0
        %v449 = vsub.s32 0, %v444
        %v450 = vsel %vm448, %v449, %v444
        %v451 = vshrl.u32 %v450, 8
        %v452 = vand.u32 %v450, 255
        %v453 = vsub.s32 0, %v452
        %v454 = vsel %vm448, %v453, %v452
        %vm455 = vcmp.lt.s32.totalorder %v445, 0
        %v456 = vsub.s32 0, %v445
        %v457 = vsel %vm455, %v456, %v445
        %v458 = vshrl.u32 %v457, 8
        %v459 = vand.u32 %v457, 255
        %v460 = vsub.s32 0, %v459
        %v461 = vsel %vm455, %v460, %v459
        %vm462 = vcmp.lt.s32.totalorder %v446, 0
        %v463 = vsub.s32 0, %v446
        %v464 = vsel %vm462, %v463, %v446
        %v465 = vshrl.u32 %v464, 8
        %v466 = vand.u32 %v464, 255
        %v467 = vsub.s32 0, %v466
        %v468 = vsel %vm462, %v467, %v466
        %vm469 = vcmp.lt.s32.totalorder %v447, 0
        %v470 = vsub.s32 0, %v447
        %v471 = vsel %vm469, %v470, %v447
        %v472 = vshrl.u32 %v471, 8
        %v473 = vand.u32 %v471, 255
        %v474 = vsub.s32 0, %v473
        %v475 = vsel %vm469, %v474, %v473
        %vm476 = vcmp.ne.s32.totalorder %v454, 0
        %vm477 = vcmp.ne.s32.totalorder %v461, 0
        %vm478 = vcmp.ne.s32.totalorder %v468, 0
        %vm479 = vcmp.ne.s32.totalorder %v475, 0
        %vm480 = vcmp.lt.s32.totalorder %v454, 0
        %vm481 = vcmp.lt.s32.totalorder %v461, 0
        %vm482 = vcmp.lt.s32.totalorder %v468, 0
        %vm483 = vcmp.lt.s32.totalorder %v475, 0
        %vm484 = vmand %vm480, %vm476
        %vm485 = vmand %vm481, %vm477
        %vm486 = vmand %vm482, %vm478
        %vm487 = vmand %vm483, %vm479
        %v488 = vadd.s32 %v454, 256
        %v489 = vadd.s32 %v461, 256
        %v490 = vadd.s32 %v468, 256
        %v491 = vadd.s32 %v475, 256
        %v492 = vsel %vm484, %v488, %v454
        %v493 = vsel %vm485, %v489, %v461
        %v494 = vsel %vm486, %v490, %v468
        %v495 = vsel %vm487, %v491, %v475
        %vm496 = vcmp.lt.s32.totalorder %v492, 0
        %v497 = vsub.s32 0, %v492
        %v498 = vsel %vm496, %v497, %v492
        %v499 = vshrl.u32 %v498, 4
        %v500 = vand.u32 %v498, 15
        %v501 = vsub.s32 0, %v500
        %v502 = vsel %vm496, %v501, %v500
        %vm503 = vcmp.lt.s32.totalorder %v493, 0
        %v504 = vsub.s32 0, %v493
        %v505 = vsel %vm503, %v504, %v493
        %v506 = vshrl.u32 %v505, 4
        %v507 = vand.u32 %v505, 15
        %v508 = vsub.s32 0, %v507
        %v509 = vsel %vm503, %v508, %v507
        %vm510 = vcmp.lt.s32.totalorder %v494, 0
        %v511 = vsub.s32 0, %v494
        %v512 = vsel %vm510, %v511, %v494
        %v513 = vshrl.u32 %v512, 4
        %v514 = vand.u32 %v512, 15
        %v515 = vsub.s32 0, %v514
        %v516 = vsel %vm510, %v515, %v514
        %vm517 = vcmp.lt.s32.totalorder %v495, 0
        %v518 = vsub.s32 0, %v495
        %v519 = vsel %vm517, %v518, %v495
        %v520 = vshrl.u32 %v519, 4
        %v521 = vand.u32 %v519, 15
        %v522 = vsub.s32 0, %v521
        %v523 = vsel %vm517, %v522, %v521
        %vm524 = vcmp.ne.s32.totalorder %v502, 0
        %vm525 = vcmp.ne.s32.totalorder %v509, 0
        %vm526 = vcmp.ne.s32.totalorder %v516, 0
        %vm527 = vcmp.ne.s32.totalorder %v523, 0
        %vm528 = vcmp.lt.s32.totalorder %v502, 0
        %vm529 = vcmp.lt.s32.totalorder %v509, 0
        %vm530 = vcmp.lt.s32.totalorder %v516, 0
        %vm531 = vcmp.lt.s32.totalorder %v523, 0
        %vm532 = vmand %vm528, %vm524
        %vm533 = vmand %vm529, %vm525
        %vm534 = vmand %vm530, %vm526
        %vm535 = vmand %vm531, %vm527
        %v536 = vadd.s32 %v502, 16
        %v537 = vadd.s32 %v509, 16
        %v538 = vadd.s32 %v516, 16
        %v539 = vadd.s32 %v523, 16
        %v540 = vsel %vm532, %v536, %v502
        %v541 = vsel %vm533, %v537, %v509
        %v542 = vsel %vm534, %v538, %v516
        %v543 = vsel %vm535, %v539, %v523
        %vm544 = vcmp.ne.s32.totalorder %v540, 15
        %vm545 = vcmp.ne.s32.totalorder %v541, 15
        %vm546 = vcmp.ne.s32.totalorder %v542, 15
        %vm547 = vcmp.ne.s32.totalorder %v543, 15
        %v548 = vsel %vm544, 1, 0
        %v549 = vsel %vm545, 1, 0
        %v550 = vsel %vm546, 1, 0
        %v551 = vsel %vm547, 1, 0
        %v552 = vcvt.s32.f32 %v548
        %v553 = vcvt.s32.f32 %v549
        %v554 = vcvt.s32.f32 %v550
        %v555 = vcvt.s32.f32 %v551
        %vm556 = vcmp.ne.s32.totalorder %v540, 0
        %vm557 = vcmp.ne.s32.totalorder %v541, 0
        %vm558 = vcmp.ne.s32.totalorder %v542, 0
        %vm559 = vcmp.ne.s32.totalorder %v543, 0
        %v560 = vsel %vm556, 1, 0
        %v561 = vsel %vm557, 1, 0
        %v562 = vsel %vm558, 1, 0
        %v563 = vsel %vm559, 1, 0
        %v564 = vcvt.s32.f32 %v560
        %v565 = vcvt.s32.f32 %v561
        %v566 = vcvt.s32.f32 %v562
        %v567 = vcvt.s32.f32 %v563
        %vm568 = vcmp.lt.s32.totalorder %v492, 240
        %vm569 = vcmp.lt.s32.totalorder %v493, 240
        %vm570 = vcmp.lt.s32.totalorder %v494, 240
        %vm571 = vcmp.lt.s32.totalorder %v495, 240
        %v572 = vsel %vm568, 1, 0
        %v573 = vsel %vm569, 1, 0
        %v574 = vsel %vm570, 1, 0
        %v575 = vsel %vm571, 1, 0
        %v576 = vcvt.s32.f32 %v572
        %v577 = vcvt.s32.f32 %v573
        %v578 = vcvt.s32.f32 %v574
        %v579 = vcvt.s32.f32 %v575
        %vm580 = vcmp.ge.s32.totalorder %v492, 16
        %vm581 = vcmp.ge.s32.totalorder %v493, 16
        %vm582 = vcmp.ge.s32.totalorder %v494, 16
        %vm583 = vcmp.ge.s32.totalorder %v495, 16
        %v584 = vsel %vm580, 1, 0
        %v585 = vsel %vm581, 1, 0
        %v586 = vsel %vm582, 1, 0
        %v587 = vsel %vm583, 1, 0
        %v588 = vcvt.s32.f32 %v584
        %v589 = vcvt.s32.f32 %v585
        %v590 = vcvt.s32.f32 %v586
        %v591 = vcvt.s32.f32 %v587
        %592 = vrot.lane.b32.xlu0 %v427, 127
        %v593 = vpop.permute.xlu0 %592
        %594 = vrot.lane.b32.xlu0 %v431, 127
        %v595 = vpop.permute.xlu0 %594
        %596 = vrot.lane.b32.xlu0 %v435, 127
        %v597 = vpop.permute.xlu0 %596
        %598 = vrot.lane.b32.xlu0 %v439, 127
        %v599 = vpop.permute.xlu0 %598
        %600 = vrot.lane.b32.xlu0 %v428, 127
        %v601 = vpop.permute.xlu0 %600
        %602 = vrot.lane.b32.xlu0 %v432, 127
        %v603 = vpop.permute.xlu0 %602
        %604 = vrot.lane.b32.xlu0 %v436, 127
        %v605 = vpop.permute.xlu0 %604
        %606 = vrot.lane.b32.xlu0 %v440, 127
        %v607 = vpop.permute.xlu0 %606
        %608 = vrot.lane.b32.xlu0 %v429, 127
        %v609 = vpop.permute.xlu0 %608
        %610 = vrot.lane.b32.xlu0 %v433, 127
        %v611 = vpop.permute.xlu0 %610
        %612 = vrot.lane.b32.xlu0 %v437, 127
        %v613 = vpop.permute.xlu0 %612
        %614 = vrot.lane.b32.xlu0 %v441, 127
        %v615 = vpop.permute.xlu0 %614
        %616 = vrot.lane.b32.xlu0 %v430, 127
        %v617 = vpop.permute.xlu0 %616
        %618 = vrot.lane.b32.xlu0 %v434, 127
        %v619 = vpop.permute.xlu0 %618
        %620 = vrot.lane.b32.xlu0 %v438, 127
        %v621 = vpop.permute.xlu0 %620
        %622 = vrot.lane.b32.xlu0 %v442, 127
        %v623 = vpop.permute.xlu0 %622
        %vm624 = vcmp.lt.s32.totalorder %v444, 127
        %v625 = vsel %vm624, %v609, %v617
        %v626 = vsel %vm624, %v611, %v619
        %v627 = vsel %vm624, %v613, %v621
        %v628 = vsel %vm624, %v615, %v623
        %v629 = vsel %vm624, %v601, %v609
        %v630 = vsel %vm624, %v603, %v611
        %v631 = vsel %vm624, %v605, %v613
        %v632 = vsel %vm624, %v607, %v615
        %v633 = vsel %vm624, %v593, %v601
        %v634 = vsel %vm624, %v595, %v603
        %v635 = vsel %vm624, %v597, %v605
        %v636 = vsel %vm624, %v599, %v607
        %v637 = vsel %vm624, %v617, %v593
        %v638 = vsel %vm624, %v619, %v595
        %v639 = vsel %vm624, %v621, %v597
        %v640 = vsel %vm624, %v623, %v599
        %v641 = vmul.f32 %v633, %v552
        %v642 = vmul.f32 %v629, %v553
        %v643 = vmul.f32 %v625, %v554
        %v644 = vmul.f32 %v637, %v555
        %v645 = vmul.f32 %v634, %v552
        %v646 = vmul.f32 %v630, %v553
        %v647 = vmul.f32 %v626, %v554
        %v648 = vmul.f32 %v638, %v555
        %v649 = vmul.f32 %v635, %v552
        %v650 = vmul.f32 %v631, %v553
        %v651 = vmul.f32 %v627, %v554
        %v652 = vmul.f32 %v639, %v555
        %v653 = vmul.f32 %v636, %v552
        %v654 = vmul.f32 %v632, %v553
        %v655 = vmul.f32 %v628, %v554
        %v656 = vmul.f32 %v640, %v555
        %657 = vrot.lane.b32.xlu0 %v427, 1
        %v658 = vpop.permute.xlu0 %657
        %659 = vrot.lane.b32.xlu0 %v431, 1
        %v660 = vpop.permute.xlu0 %659
        %661 = vrot.lane.b32.xlu0 %v435, 1
        %v662 = vpop.permute.xlu0 %661
        %663 = vrot.lane.b32.xlu0 %v439, 1
        %v664 = vpop.permute.xlu0 %663
        %665 = vrot.lane.b32.xlu0 %v428, 1
        %v666 = vpop.permute.xlu0 %665
        %667 = vrot.lane.b32.xlu0 %v432, 1
        %v668 = vpop.permute.xlu0 %667
        %669 = vrot.lane.b32.xlu0 %v436, 1
        %v670 = vpop.permute.xlu0 %669
        %671 = vrot.lane.b32.xlu0 %v440, 1
        %v672 = vpop.permute.xlu0 %671
        %673 = vrot.lane.b32.xlu0 %v429, 1
        %v674 = vpop.permute.xlu0 %673
        %675 = vrot.lane.b32.xlu0 %v433, 1
        %v676 = vpop.permute.xlu0 %675
        %677 = vrot.lane.b32.xlu0 %v437, 1
        %v678 = vpop.permute.xlu0 %677
        %679 = vrot.lane.b32.xlu0 %v441, 1
        %v680 = vpop.permute.xlu0 %679
        %681 = vrot.lane.b32.xlu0 %v430, 1
        %v682 = vpop.permute.xlu0 %681
        %683 = vrot.lane.b32.xlu0 %v434, 1
        %v684 = vpop.permute.xlu0 %683
        %685 = vrot.lane.b32.xlu0 %v438, 1
        %v686 = vpop.permute.xlu0 %685
        %687 = vrot.lane.b32.xlu0 %v442, 1
        %v688 = vpop.permute.xlu0 %687
        %vm689 = vcmp.lt.s32.totalorder %v444, 1
        %v690 = vsel %vm689, %v674, %v682
        %v691 = vsel %vm689, %v676, %v684
        %v692 = vsel %vm689, %v678, %v686
        %v693 = vsel %vm689, %v680, %v688
        %v694 = vsel %vm689, %v666, %v674
        %v695 = vsel %vm689, %v668, %v676
        %v696 = vsel %vm689, %v670, %v678
        %v697 = vsel %vm689, %v672, %v680
        %v698 = vsel %vm689, %v658, %v666
        %v699 = vsel %vm689, %v660, %v668
        %v700 = vsel %vm689, %v662, %v670
        %v701 = vsel %vm689, %v664, %v672
        %v702 = vsel %vm689, %v682, %v658
        %v703 = vsel %vm689, %v684, %v660
        %v704 = vsel %vm689, %v686, %v662
        %v705 = vsel %vm689, %v688, %v664
        %v706 = vmul.f32 %v702, %v564
        %v707 = vmul.f32 %v698, %v565
        %v708 = vmul.f32 %v694, %v566
        %v709 = vmul.f32 %v690, %v567
        %v710 = vmul.f32 %v703, %v564
        %v711 = vmul.f32 %v699, %v565
        %v712 = vmul.f32 %v695, %v566
        %v713 = vmul.f32 %v691, %v567
        %v714 = vmul.f32 %v704, %v564
        %v715 = vmul.f32 %v700, %v565
        %v716 = vmul.f32 %v696, %v566
        %v717 = vmul.f32 %v692, %v567
        %v718 = vmul.f32 %v705, %v564
        %v719 = vmul.f32 %v701, %v565
        %v720 = vmul.f32 %v697, %v566
        %v721 = vmul.f32 %v693, %v567
        %v722 = vld [vmem:[%s3] sm:$0xff]
        %v723 = vld [vmem:[%s3 + $0x8] sm:$0xff]
        %v724 = vld [vmem:[%s3 + $0x10] sm:$0xff]
        %v725 = vld [vmem:[%s3 + $0x18] sm:$0xff]
        %727 = vset.pattern.permute.xlu0 3
        %728 = vperm.xlu0 %727, %v722
        %v729 = vpop.permute.xlu0 %728
        %732 = vset.pattern.permute.xlu0 3
        %733 = vperm.xlu0 %732, %v723
        %v734 = vpop.permute.xlu0 %733
        %737 = vset.pattern.permute.xlu0 3
        %738 = vperm.xlu0 %737, %v724
        %v739 = vpop.permute.xlu0 %738
        %742 = vset.pattern.permute.xlu0 3
        %743 = vperm.xlu0 %742, %v725
        %v744 = vpop.permute.xlu0 %743
        %v746 = vmul.f32 %v706, %v729
        %v747 = vmul.f32 %v707, %v729
        %v748 = vmul.f32 %v708, %v729
        %v749 = vmul.f32 %v709, %v729
        %v750 = vmul.f32 %v710, %v734
        %v751 = vmul.f32 %v711, %v734
        %v752 = vmul.f32 %v712, %v734
        %v753 = vmul.f32 %v713, %v734
        %v754 = vmul.f32 %v714, %v739
        %v755 = vmul.f32 %v715, %v739
        %v756 = vmul.f32 %v716, %v739
        %v757 = vmul.f32 %v717, %v739
        %v758 = vmul.f32 %v718, %v744
        %v759 = vmul.f32 %v719, %v744
        %v760 = vmul.f32 %v720, %v744
        %v761 = vmul.f32 %v721, %v744
        %762 = vset.pattern.permute.xlu0 4
        %763 = vperm.xlu0 %762, %v722
        %v764 = vpop.permute.xlu0 %763
        %766 = vset.pattern.permute.xlu0 4
        %767 = vperm.xlu0 %766, %v723
        %v768 = vpop.permute.xlu0 %767
        %770 = vset.pattern.permute.xlu0 4
        %771 = vperm.xlu0 %770, %v724
        %v772 = vpop.permute.xlu0 %771
        %774 = vset.pattern.permute.xlu0 4
        %775 = vperm.xlu0 %774, %v725
        %v776 = vpop.permute.xlu0 %775
        %v778 = vmul.f32 %v427, %v764
        %v779 = vmul.f32 %v428, %v764
        %v780 = vmul.f32 %v429, %v764
        %v781 = vmul.f32 %v430, %v764
        %v782 = vmul.f32 %v431, %v768
        %v783 = vmul.f32 %v432, %v768
        %v784 = vmul.f32 %v433, %v768
        %v785 = vmul.f32 %v434, %v768
        %v786 = vmul.f32 %v435, %v772
        %v787 = vmul.f32 %v436, %v772
        %v788 = vmul.f32 %v437, %v772
        %v789 = vmul.f32 %v438, %v772
        %v790 = vmul.f32 %v439, %v776
        %v791 = vmul.f32 %v440, %v776
        %v792 = vmul.f32 %v441, %v776
        %v793 = vmul.f32 %v442, %v776
        %v794 = vadd.f32 %v746, %v778
        %v795 = vadd.f32 %v747, %v779
        %v796 = vadd.f32 %v748, %v780
        %v797 = vadd.f32 %v749, %v781
        %v798 = vadd.f32 %v750, %v782
        %v799 = vadd.f32 %v751, %v783
        %v800 = vadd.f32 %v752, %v784
        %v801 = vadd.f32 %v753, %v785
        %v802 = vadd.f32 %v754, %v786
        %v803 = vadd.f32 %v755, %v787
        %v804 = vadd.f32 %v756, %v788
        %v805 = vadd.f32 %v757, %v789
        %v806 = vadd.f32 %v758, %v790
        %v807 = vadd.f32 %v759, %v791
        %v808 = vadd.f32 %v760, %v792
        %v809 = vadd.f32 %v761, %v793
        %810 = vset.pattern.permute.xlu0 5
        %811 = vperm.xlu0 %810, %v722
        %v812 = vpop.permute.xlu0 %811
        %814 = vset.pattern.permute.xlu0 5
        %815 = vperm.xlu0 %814, %v723
        %v816 = vpop.permute.xlu0 %815
        %818 = vset.pattern.permute.xlu0 5
        %819 = vperm.xlu0 %818, %v724
        %v820 = vpop.permute.xlu0 %819
        %822 = vset.pattern.permute.xlu0 5
        %823 = vperm.xlu0 %822, %v725
        %v824 = vpop.permute.xlu0 %823
        %v826 = vmul.f32 %v641, %v812
        %v827 = vmul.f32 %v642, %v812
        %v828 = vmul.f32 %v643, %v812
        %v829 = vmul.f32 %v644, %v812
        %v830 = vmul.f32 %v645, %v816
        %v831 = vmul.f32 %v646, %v816
        %v832 = vmul.f32 %v647, %v816
        %v833 = vmul.f32 %v648, %v816
        %v834 = vmul.f32 %v649, %v820
        %v835 = vmul.f32 %v650, %v820
        %v836 = vmul.f32 %v651, %v820
        %v837 = vmul.f32 %v652, %v820
        %v838 = vmul.f32 %v653, %v824
        %v839 = vmul.f32 %v654, %v824
        %v840 = vmul.f32 %v655, %v824
        %v841 = vmul.f32 %v656, %v824
        %v842 = vadd.f32 %v794, %v826
        %v843 = vadd.f32 %v795, %v827
        %v844 = vadd.f32 %v796, %v828
        %v845 = vadd.f32 %v797, %v829
        %v846 = vadd.f32 %v798, %v830
        %v847 = vadd.f32 %v799, %v831
        %v848 = vadd.f32 %v800, %v832
        %v849 = vadd.f32 %v801, %v833
        %v850 = vadd.f32 %v802, %v834
        %v851 = vadd.f32 %v803, %v835
        %v852 = vadd.f32 %v804, %v836
        %v853 = vadd.f32 %v805, %v837
        %v854 = vadd.f32 %v806, %v838
        %v855 = vadd.f32 %v807, %v839
        %v856 = vadd.f32 %v808, %v840
        %v857 = vadd.f32 %v809, %v841
        %858 = vset.pattern.permute.xlu0 0
        %859 = vperm.xlu0 %858, %v722
        %v860 = vpop.permute.xlu0 %859
        %862 = vset.pattern.permute.xlu0 0
        %863 = vperm.xlu0 %862, %v723
        %v864 = vpop.permute.xlu0 %863
        %866 = vset.pattern.permute.xlu0 0
        %867 = vperm.xlu0 %866, %v724
        %v868 = vpop.permute.xlu0 %867
        %870 = vset.pattern.permute.xlu0 0
        %871 = vperm.xlu0 %870, %v725
        %v872 = vpop.permute.xlu0 %871
        %v874 = vmul.f32 %v706, %v860
        %v875 = vmul.f32 %v707, %v860
        %v876 = vmul.f32 %v708, %v860
        %v877 = vmul.f32 %v709, %v860
        %v878 = vmul.f32 %v710, %v864
        %v879 = vmul.f32 %v711, %v864
        %v880 = vmul.f32 %v712, %v864
        %v881 = vmul.f32 %v713, %v864
        %v882 = vmul.f32 %v714, %v868
        %v883 = vmul.f32 %v715, %v868
        %v884 = vmul.f32 %v716, %v868
        %v885 = vmul.f32 %v717, %v868
        %v886 = vmul.f32 %v718, %v872
        %v887 = vmul.f32 %v719, %v872
        %v888 = vmul.f32 %v720, %v872
        %v889 = vmul.f32 %v721, %v872
        %890 = vset.pattern.permute.xlu0 1
        %891 = vperm.xlu0 %890, %v722
        %v892 = vpop.permute.xlu0 %891
        %894 = vset.pattern.permute.xlu0 1
        %895 = vperm.xlu0 %894, %v723
        %v896 = vpop.permute.xlu0 %895
        %898 = vset.pattern.permute.xlu0 1
        %899 = vperm.xlu0 %898, %v724
        %v900 = vpop.permute.xlu0 %899
        %902 = vset.pattern.permute.xlu0 1
        %903 = vperm.xlu0 %902, %v725
        %v904 = vpop.permute.xlu0 %903
        %v906 = vmul.f32 %v427, %v892
        %v907 = vmul.f32 %v428, %v892
        %v908 = vmul.f32 %v429, %v892
        %v909 = vmul.f32 %v430, %v892
        %v910 = vmul.f32 %v431, %v896
        %v911 = vmul.f32 %v432, %v896
        %v912 = vmul.f32 %v433, %v896
        %v913 = vmul.f32 %v434, %v896
        %v914 = vmul.f32 %v435, %v900
        %v915 = vmul.f32 %v436, %v900
        %v916 = vmul.f32 %v437, %v900
        %v917 = vmul.f32 %v438, %v900
        %v918 = vmul.f32 %v439, %v904
        %v919 = vmul.f32 %v440, %v904
        %v920 = vmul.f32 %v441, %v904
        %v921 = vmul.f32 %v442, %v904
        %v922 = vadd.f32 %v874, %v906
        %v923 = vadd.f32 %v875, %v907
        %v924 = vadd.f32 %v876, %v908
        %v925 = vadd.f32 %v877, %v909
        %v926 = vadd.f32 %v878, %v910
        %v927 = vadd.f32 %v879, %v911
        %v928 = vadd.f32 %v880, %v912
        %v929 = vadd.f32 %v881, %v913
        %v930 = vadd.f32 %v882, %v914
        %v931 = vadd.f32 %v883, %v915
        %v932 = vadd.f32 %v884, %v916
        %v933 = vadd.f32 %v885, %v917
        %v934 = vadd.f32 %v886, %v918
        %v935 = vadd.f32 %v887, %v919
        %v936 = vadd.f32 %v888, %v920
        %v937 = vadd.f32 %v889, %v921
        %938 = vset.pattern.permute.xlu0 2
        %939 = vperm.xlu0 %938, %v722
        %v940 = vpop.permute.xlu0 %939
        %942 = vset.pattern.permute.xlu0 2
        %943 = vperm.xlu0 %942, %v723
        %v944 = vpop.permute.xlu0 %943
        %946 = vset.pattern.permute.xlu0 2
        %947 = vperm.xlu0 %946, %v724
        %v948 = vpop.permute.xlu0 %947
        %950 = vset.pattern.permute.xlu0 2
        %951 = vperm.xlu0 %950, %v725
        %v952 = vpop.permute.xlu0 %951
        %v954 = vmul.f32 %v641, %v940
        %v955 = vmul.f32 %v642, %v940
        %v956 = vmul.f32 %v643, %v940
        %v957 = vmul.f32 %v644, %v940
        %v958 = vmul.f32 %v645, %v944
        %v959 = vmul.f32 %v646, %v944
        %v960 = vmul.f32 %v647, %v944
        %v961 = vmul.f32 %v648, %v944
        %v962 = vmul.f32 %v649, %v948
        %v963 = vmul.f32 %v650, %v948
        %v964 = vmul.f32 %v651, %v948
        %v965 = vmul.f32 %v652, %v948
        %v966 = vmul.f32 %v653, %v952
        %v967 = vmul.f32 %v654, %v952
        %v968 = vmul.f32 %v655, %v952
        %v969 = vmul.f32 %v656, %v952
        %v970 = vadd.f32 %v922, %v954
        %v971 = vadd.f32 %v923, %v955
        %v972 = vadd.f32 %v924, %v956
        %v973 = vadd.f32 %v925, %v957
        %v974 = vadd.f32 %v926, %v958
        %v975 = vadd.f32 %v927, %v959
        %v976 = vadd.f32 %v928, %v960
        %v977 = vadd.f32 %v929, %v961
        %v978 = vadd.f32 %v930, %v962
        %v979 = vadd.f32 %v931, %v963
        %v980 = vadd.f32 %v932, %v964
        %v981 = vadd.f32 %v933, %v965
        %v982 = vadd.f32 %v934, %v966
        %v983 = vadd.f32 %v935, %v967
        %v984 = vadd.f32 %v936, %v968
        %v985 = vadd.f32 %v937, %v969
        %986 = vrot.lane.b32.xlu0 %v970, 16
        %v987 = vpop.permute.xlu0 %986
        %988 = vrot.lane.b32.xlu0 %v974, 16
        %v989 = vpop.permute.xlu0 %988
        %990 = vrot.lane.b32.xlu0 %v978, 16
        %v991 = vpop.permute.xlu0 %990
        %992 = vrot.lane.b32.xlu0 %v982, 16
        %v993 = vpop.permute.xlu0 %992
        %994 = vrot.lane.b32.xlu0 %v971, 16
        %v995 = vpop.permute.xlu0 %994
        %996 = vrot.lane.b32.xlu0 %v975, 16
        %v997 = vpop.permute.xlu0 %996
        %998 = vrot.lane.b32.xlu0 %v979, 16
        %v999 = vpop.permute.xlu0 %998
        %1000 = vrot.lane.b32.xlu0 %v983, 16
        %v1001 = vpop.permute.xlu0 %1000
        %1002 = vrot.lane.b32.xlu0 %v972, 16
        %v1003 = vpop.permute.xlu0 %1002
        %1004 = vrot.lane.b32.xlu0 %v976, 16
        %v1005 = vpop.permute.xlu0 %1004
        %1006 = vrot.lane.b32.xlu0 %v980, 16
        %v1007 = vpop.permute.xlu0 %1006
        %1008 = vrot.lane.b32.xlu0 %v984, 16
        %v1009 = vpop.permute.xlu0 %1008
        %1010 = vrot.lane.b32.xlu0 %v973, 16
        %v1011 = vpop.permute.xlu0 %1010
        %1012 = vrot.lane.b32.xlu0 %v977, 16
        %v1013 = vpop.permute.xlu0 %1012
        %1014 = vrot.lane.b32.xlu0 %v981, 16
        %v1015 = vpop.permute.xlu0 %1014
        %1016 = vrot.lane.b32.xlu0 %v985, 16
        %v1017 = vpop.permute.xlu0 %1016
        %vm1018 = vcmp.lt.s32.totalorder %v444, 16
        %v1019 = vsel %vm1018, %v1003, %v1011
        %v1020 = vsel %vm1018, %v1005, %v1013
        %v1021 = vsel %vm1018, %v1007, %v1015
        %v1022 = vsel %vm1018, %v1009, %v1017
        %v1023 = vsel %vm1018, %v995, %v1003
        %v1024 = vsel %vm1018, %v997, %v1005
        %v1025 = vsel %vm1018, %v999, %v1007
        %v1026 = vsel %vm1018, %v1001, %v1009
        %v1027 = vsel %vm1018, %v987, %v995
        %v1028 = vsel %vm1018, %v989, %v997
        %v1029 = vsel %vm1018, %v991, %v999
        %v1030 = vsel %vm1018, %v993, %v1001
        %v1031 = vsel %vm1018, %v1011, %v987
        %v1032 = vsel %vm1018, %v1013, %v989
        %v1033 = vsel %vm1018, %v1015, %v991
        %v1034 = vsel %vm1018, %v1017, %v993
        %v1035 = vmul.f32 %v1031, %v588
        %v1036 = vmul.f32 %v1027, %v589
        %v1037 = vmul.f32 %v1023, %v590
        %v1038 = vmul.f32 %v1019, %v591
        %v1039 = vmul.f32 %v1032, %v588
        %v1040 = vmul.f32 %v1028, %v589
        %v1041 = vmul.f32 %v1024, %v590
        %v1042 = vmul.f32 %v1020, %v591
        %v1043 = vmul.f32 %v1033, %v588
        %v1044 = vmul.f32 %v1029, %v589
        %v1045 = vmul.f32 %v1025, %v590
        %v1046 = vmul.f32 %v1021, %v591
        %v1047 = vmul.f32 %v1034, %v588
        %v1048 = vmul.f32 %v1030, %v589
        %v1049 = vmul.f32 %v1026, %v590
        %v1050 = vmul.f32 %v1022, %v591
        %v1051 = vadd.f32 %v842, %v1035
        %v1052 = vadd.f32 %v843, %v1036
        %v1053 = vadd.f32 %v844, %v1037
        %v1054 = vadd.f32 %v845, %v1038
        %v1055 = vadd.f32 %v846, %v1039
        %v1056 = vadd.f32 %v847, %v1040
        %v1057 = vadd.f32 %v848, %v1041
        %v1058 = vadd.f32 %v849, %v1042
        %v1059 = vadd.f32 %v850, %v1043
        %v1060 = vadd.f32 %v851, %v1044
        %v1061 = vadd.f32 %v852, %v1045
        %v1062 = vadd.f32 %v853, %v1046
        %v1063 = vadd.f32 %v854, %v1047
        %v1064 = vadd.f32 %v855, %v1048
        %v1065 = vadd.f32 %v856, %v1049
        %v1066 = vadd.f32 %v857, %v1050
        %1067 = vset.pattern.permute.xlu0 6
        %1068 = vperm.xlu0 %1067, %v722
        %v1069 = vpop.permute.xlu0 %1068
        %1071 = vset.pattern.permute.xlu0 6
        %1072 = vperm.xlu0 %1071, %v723
        %v1073 = vpop.permute.xlu0 %1072
        %1075 = vset.pattern.permute.xlu0 6
        %1076 = vperm.xlu0 %1075, %v724
        %v1077 = vpop.permute.xlu0 %1076
        %1079 = vset.pattern.permute.xlu0 6
        %1080 = vperm.xlu0 %1079, %v725
        %v1081 = vpop.permute.xlu0 %1080
        %v1083 = vmul.f32 %v706, %v1069
        %v1084 = vmul.f32 %v707, %v1069
        %v1085 = vmul.f32 %v708, %v1069
        %v1086 = vmul.f32 %v709, %v1069
        %v1087 = vmul.f32 %v710, %v1073
        %v1088 = vmul.f32 %v711, %v1073
        %v1089 = vmul.f32 %v712, %v1073
        %v1090 = vmul.f32 %v713, %v1073
        %v1091 = vmul.f32 %v714, %v1077
        %v1092 = vmul.f32 %v715, %v1077
        %v1093 = vmul.f32 %v716, %v1077
        %v1094 = vmul.f32 %v717, %v1077
        %v1095 = vmul.f32 %v718, %v1081
        %v1096 = vmul.f32 %v719, %v1081
        %v1097 = vmul.f32 %v720, %v1081
        %v1098 = vmul.f32 %v721, %v1081
        %1099 = vset.pattern.permute.xlu0 7
        %1100 = vperm.xlu0 %1099, %v722
        %v1101 = vpop.permute.xlu0 %1100
        %1103 = vset.pattern.permute.xlu0 7
        %1104 = vperm.xlu0 %1103, %v723
        %v1105 = vpop.permute.xlu0 %1104
        %1107 = vset.pattern.permute.xlu0 7
        %1108 = vperm.xlu0 %1107, %v724
        %v1109 = vpop.permute.xlu0 %1108
        %1111 = vset.pattern.permute.xlu0 7
        %1112 = vperm.xlu0 %1111, %v725
        %v1113 = vpop.permute.xlu0 %1112
        %v1115 = vmul.f32 %v427, %v1101
        %v1116 = vmul.f32 %v428, %v1101
        %v1117 = vmul.f32 %v429, %v1101
        %v1118 = vmul.f32 %v430, %v1101
        %v1119 = vmul.f32 %v431, %v1105
        %v1120 = vmul.f32 %v432, %v1105
        %v1121 = vmul.f32 %v433, %v1105
        %v1122 = vmul.f32 %v434, %v1105
        %v1123 = vmul.f32 %v435, %v1109
        %v1124 = vmul.f32 %v436, %v1109
        %v1125 = vmul.f32 %v437, %v1109
        %v1126 = vmul.f32 %v438, %v1109
        %v1127 = vmul.f32 %v439, %v1113
        %v1128 = vmul.f32 %v440, %v1113
        %v1129 = vmul.f32 %v441, %v1113
        %v1130 = vmul.f32 %v442, %v1113
        %v1131 = vadd.f32 %v1083, %v1115
        %v1132 = vadd.f32 %v1084, %v1116
        %v1133 = vadd.f32 %v1085, %v1117
        %v1134 = vadd.f32 %v1086, %v1118
        %v1135 = vadd.f32 %v1087, %v1119
        %v1136 = vadd.f32 %v1088, %v1120
        %v1137 = vadd.f32 %v1089, %v1121
        %v1138 = vadd.f32 %v1090, %v1122
        %v1139 = vadd.f32 %v1091, %v1123
        %v1140 = vadd.f32 %v1092, %v1124
        %v1141 = vadd.f32 %v1093, %v1125
        %v1142 = vadd.f32 %v1094, %v1126
        %v1143 = vadd.f32 %v1095, %v1127
        %v1144 = vadd.f32 %v1096, %v1128
        %v1145 = vadd.f32 %v1097, %v1129
        %v1146 = vadd.f32 %v1098, %v1130
        %1147 = vset.pattern.permute.xlu0 8
        %1148 = vperm.xlu0 %1147, %v722
        %v1149 = vpop.permute.xlu0 %1148
        %1151 = vset.pattern.permute.xlu0 8
        %1152 = vperm.xlu0 %1151, %v723
        %v1153 = vpop.permute.xlu0 %1152
        %1155 = vset.pattern.permute.xlu0 8
        %1156 = vperm.xlu0 %1155, %v724
        %v1157 = vpop.permute.xlu0 %1156
        %1159 = vset.pattern.permute.xlu0 8
        %1160 = vperm.xlu0 %1159, %v725
        %v1161 = vpop.permute.xlu0 %1160
        %v1163 = vmul.f32 %v641, %v1149
        %v1164 = vmul.f32 %v642, %v1149
        %v1165 = vmul.f32 %v643, %v1149
        %v1166 = vmul.f32 %v644, %v1149
        %v1167 = vmul.f32 %v645, %v1153
        %v1168 = vmul.f32 %v646, %v1153
        %v1169 = vmul.f32 %v647, %v1153
        %v1170 = vmul.f32 %v648, %v1153
        %v1171 = vmul.f32 %v649, %v1157
        %v1172 = vmul.f32 %v650, %v1157
        %v1173 = vmul.f32 %v651, %v1157
        %v1174 = vmul.f32 %v652, %v1157
        %v1175 = vmul.f32 %v653, %v1161
        %v1176 = vmul.f32 %v654, %v1161
        %v1177 = vmul.f32 %v655, %v1161
        %v1178 = vmul.f32 %v656, %v1161
        %v1179 = vadd.f32 %v1131, %v1163
        %v1180 = vadd.f32 %v1132, %v1164
        %v1181 = vadd.f32 %v1133, %v1165
        %v1182 = vadd.f32 %v1134, %v1166
        %v1183 = vadd.f32 %v1135, %v1167
        %v1184 = vadd.f32 %v1136, %v1168
        %v1185 = vadd.f32 %v1137, %v1169
        %v1186 = vadd.f32 %v1138, %v1170
        %v1187 = vadd.f32 %v1139, %v1171
        %v1188 = vadd.f32 %v1140, %v1172
        %v1189 = vadd.f32 %v1141, %v1173
        %v1190 = vadd.f32 %v1142, %v1174
        %v1191 = vadd.f32 %v1143, %v1175
        %v1192 = vadd.f32 %v1144, %v1176
        %v1193 = vadd.f32 %v1145, %v1177
        %v1194 = vadd.f32 %v1146, %v1178
        %1195 = vrot.lane.b32.xlu0 %v1179, 112
        %v1196 = vpop.permute.xlu0 %1195
        %1197 = vrot.lane.b32.xlu0 %v1183, 112
        %v1198 = vpop.permute.xlu0 %1197
        %1199 = vrot.lane.b32.xlu0 %v1187, 112
        %v1200 = vpop.permute.xlu0 %1199
        %1201 = vrot.lane.b32.xlu0 %v1191, 112
        %v1202 = vpop.permute.xlu0 %1201
        %1203 = vrot.lane.b32.xlu0 %v1180, 112
        %v1204 = vpop.permute.xlu0 %1203
        %1205 = vrot.lane.b32.xlu0 %v1184, 112
        %v1206 = vpop.permute.xlu0 %1205
        %1207 = vrot.lane.b32.xlu0 %v1188, 112
        %v1208 = vpop.permute.xlu0 %1207
        %1209 = vrot.lane.b32.xlu0 %v1192, 112
        %v1210 = vpop.permute.xlu0 %1209
        %1211 = vrot.lane.b32.xlu0 %v1181, 112
        %v1212 = vpop.permute.xlu0 %1211
        %1213 = vrot.lane.b32.xlu0 %v1185, 112
        %v1214 = vpop.permute.xlu0 %1213
        %1215 = vrot.lane.b32.xlu0 %v1189, 112
        %v1216 = vpop.permute.xlu0 %1215
        %1217 = vrot.lane.b32.xlu0 %v1193, 112
        %v1218 = vpop.permute.xlu0 %1217
        %1219 = vrot.lane.b32.xlu0 %v1182, 112
        %v1220 = vpop.permute.xlu0 %1219
        %1221 = vrot.lane.b32.xlu0 %v1186, 112
        %v1222 = vpop.permute.xlu0 %1221
        %1223 = vrot.lane.b32.xlu0 %v1190, 112
        %v1224 = vpop.permute.xlu0 %1223
        %1225 = vrot.lane.b32.xlu0 %v1194, 112
        %v1226 = vpop.permute.xlu0 %1225
        %vm1227 = vcmp.lt.s32.totalorder %v444, 112
        %v1228 = vsel %vm1227, %v1212, %v1220
        %v1229 = vsel %vm1227, %v1214, %v1222
        %v1230 = vsel %vm1227, %v1216, %v1224
        %v1231 = vsel %vm1227, %v1218, %v1226
        %v1232 = vsel %vm1227, %v1204, %v1212
        %v1233 = vsel %vm1227, %v1206, %v1214
        %v1234 = vsel %vm1227, %v1208, %v1216
        %v1235 = vsel %vm1227, %v1210, %v1218
        %v1236 = vsel %vm1227, %v1196, %v1204
        %v1237 = vsel %vm1227, %v1198, %v1206
        %v1238 = vsel %vm1227, %v1200, %v1208
        %v1239 = vsel %vm1227, %v1202, %v1210
        %v1240 = vsel %vm1227, %v1220, %v1196
        %v1241 = vsel %vm1227, %v1222, %v1198
        %v1242 = vsel %vm1227, %v1224, %v1200
        %v1243 = vsel %vm1227, %v1226, %v1202
        %v1244 = vmul.f32 %v1236, %v576
        %v1245 = vmul.f32 %v1232, %v577
        %v1246 = vmul.f32 %v1228, %v578
        %v1247 = vmul.f32 %v1240, %v579
        %v1248 = vmul.f32 %v1237, %v576
        %v1249 = vmul.f32 %v1233, %v577
        %v1250 = vmul.f32 %v1229, %v578
        %v1251 = vmul.f32 %v1241, %v579
        %v1252 = vmul.f32 %v1238, %v576
        %v1253 = vmul.f32 %v1234, %v577
        %v1254 = vmul.f32 %v1230, %v578
        %v1255 = vmul.f32 %v1242, %v579
        %v1256 = vmul.f32 %v1239, %v576
        %v1257 = vmul.f32 %v1235, %v577
        %v1258 = vmul.f32 %v1231, %v578
        %v1259 = vmul.f32 %v1243, %v579
        %v1260 = vadd.f32 %v1051, %v1244
        %v1261 = vadd.f32 %v1052, %v1245
        %v1262 = vadd.f32 %v1053, %v1246
        %v1263 = vadd.f32 %v1054, %v1247
        %v1264 = vadd.f32 %v1055, %v1248
        %v1265 = vadd.f32 %v1056, %v1249
        %v1266 = vadd.f32 %v1057, %v1250
        %v1267 = vadd.f32 %v1058, %v1251
        %v1268 = vadd.f32 %v1059, %v1252
        %v1269 = vadd.f32 %v1060, %v1253
        %v1270 = vadd.f32 %v1061, %v1254
        %v1271 = vadd.f32 %v1062, %v1255
        %v1272 = vadd.f32 %v1063, %v1256
        %v1273 = vadd.f32 %v1064, %v1257
        %v1274 = vadd.f32 %v1065, %v1258
        %v1275 = vadd.f32 %v1066, %v1259
        %v1276 = vld [vmem:[%s4] sm:$0xff]
        %v1277 = vld [vmem:[%s4 + $0x8] sm:$0xff]
        %v1278 = vld [vmem:[%s4 + $0x10] sm:$0xff]
        %v1279 = vld [vmem:[%s4 + $0x18] sm:$0xff]
        %1281 = vset.pattern.permute.xlu0 0
        %1282 = vperm.xlu0 %1281, %v1276
        %v1283 = vpop.permute.xlu0 %1282
        %1286 = vset.pattern.permute.xlu0 0
        %1287 = vperm.xlu0 %1286, %v1277
        %v1288 = vpop.permute.xlu0 %1287
        %1291 = vset.pattern.permute.xlu0 0
        %1292 = vperm.xlu0 %1291, %v1278
        %v1293 = vpop.permute.xlu0 %1292
        %1296 = vset.pattern.permute.xlu0 0
        %1297 = vperm.xlu0 %1296, %v1279
        %v1298 = vpop.permute.xlu0 %1297
        %v1300 = vadd.f32 %v1260, %v1283
        %v1301 = vadd.f32 %v1261, %v1283
        %v1302 = vadd.f32 %v1262, %v1283
        %v1303 = vadd.f32 %v1263, %v1283
        %v1304 = vadd.f32 %v1264, %v1288
        %v1305 = vadd.f32 %v1265, %v1288
        %v1306 = vadd.f32 %v1266, %v1288
        %v1307 = vadd.f32 %v1267, %v1288
        %v1308 = vadd.f32 %v1268, %v1293
        %v1309 = vadd.f32 %v1269, %v1293
        %v1310 = vadd.f32 %v1270, %v1293
        %v1311 = vadd.f32 %v1271, %v1293
        %v1312 = vadd.f32 %v1272, %v1298
        %v1313 = vadd.f32 %v1273, %v1298
        %v1314 = vadd.f32 %v1274, %v1298
        %v1315 = vadd.f32 %v1275, %v1298
        %v1316 = vmax.f32 %v1300, 0.0
        %v1317 = vmax.f32 %v1301, 0.0
        %v1318 = vmax.f32 %v1302, 0.0
        %v1319 = vmax.f32 %v1303, 0.0
        %v1320 = vmax.f32 %v1304, 0.0
        %v1321 = vmax.f32 %v1305, 0.0
        %v1322 = vmax.f32 %v1306, 0.0
        %v1323 = vmax.f32 %v1307, 0.0
        %v1324 = vmax.f32 %v1308, 0.0
        %v1325 = vmax.f32 %v1309, 0.0
        %v1326 = vmax.f32 %v1310, 0.0
        %v1327 = vmax.f32 %v1311, 0.0
        %v1328 = vmax.f32 %v1312, 0.0
        %v1329 = vmax.f32 %v1313, 0.0
        %v1330 = vmax.f32 %v1314, 0.0
        %v1331 = vmax.f32 %v1315, 0.0
        %v1332 = vld [vmem:[%s5] sm:$0xf]
        %v1333 = vpack.c.bf16 %v1320, %v1316
        %v1334 = vpack.c.bf16 %v1321, %v1317
        %v1335 = vpack.c.bf16 %v1322, %v1318
        %v1336 = vpack.c.bf16 %v1323, %v1319
        %v1337 = vpack.c.bf16 %v1328, %v1324
        %v1338 = vpack.c.bf16 %v1329, %v1325
        %v1339 = vpack.c.bf16 %v1330, %v1326
        %v1340 = vpack.c.bf16 %v1331, %v1327
        %v1341 = vld [vmem:[%s6] sm:$0xff]
        %1343 = vset.pattern.permute.xlu0 0
        %1344 = vperm.xlu0 %1343, %v1341
        %v1345 = vpop.permute.xlu0 %1344
        %vm1347 = vcmask 261120
        %v1349 = vsel %vm1347, %v1332, 0
        %1351 = vmatpush.bf16.msra.mxu0 0
        %1352 = vmatpush.bf16.msra.mxu0 0
        %1353 = vmatpush.bf16.msra.mxu0 0
        %1354 = vmatpush.bf16.msra.mxu0 0
        %1355 = vmatpush.bf16.msra.mxu0 0
        %1356 = vmatpush.bf16.msra.mxu0 0
        %1357 = vmatpush.bf16.msra.mxu0 %v1337
        %1358 = vmatpush.bf16.msra.mxu0 %v1333
        %1359 = vmatmul.bf16.gmra.mxu0 %v1349
        %v1360 = vpop.f32.mrf.mxu0
        %v1361 = vadd.f32 %v1345, %v1360
        %v1362 = vpop.f32.mrf.mxu0
        %1363 = vdwg.mxu0
        %1364 = vmatpush.bf16.msra.mxu0 0
        %1365 = vmatpush.bf16.msra.mxu0 0
        %1366 = vmatpush.bf16.msra.mxu0 0
        %1367 = vmatpush.bf16.msra.mxu0 0
        %1368 = vmatpush.bf16.msra.mxu0 0
        %1369 = vmatpush.bf16.msra.mxu0 0
        %1370 = vmatpush.bf16.msra.mxu0 %v1338
        %1371 = vmatpush.bf16.msra.mxu0 %v1334
        %1372 = vmatmul.bf16.gmra.mxu0 %v1349
        %v1373 = vpop.f32.mrf.mxu0
        %v1374 = vadd.f32 %v1345, %v1373
        %v1375 = vpop.f32.mrf.mxu0
        %1376 = vdwg.mxu0
        %1377 = vmatpush.bf16.msra.mxu0 0
        %1378 = vmatpush.bf16.msra.mxu0 0
        %1379 = vmatpush.bf16.msra.mxu0 0
        %1380 = vmatpush.bf16.msra.mxu0 0
        %1381 = vmatpush.bf16.msra.mxu0 0
        %1382 = vmatpush.bf16.msra.mxu0 0
        %1383 = vmatpush.bf16.msra.mxu0 %v1339
        %1384 = vmatpush.bf16.msra.mxu0 %v1335
        %1385 = vmatmul.bf16.gmra.mxu0 %v1349
        %v1386 = vpop.f32.mrf.mxu0
        %v1387 = vadd.f32 %v1345, %v1386
        %v1388 = vpop.f32.mrf.mxu0
        %1389 = vdwg.mxu0
        %1390 = vmatpush.bf16.msra.mxu0 0
        %1391 = vmatpush.bf16.msra.mxu0 0
        %1392 = vmatpush.bf16.msra.mxu0 0
        %1393 = vmatpush.bf16.msra.mxu0 0
        %1394 = vmatpush.bf16.msra.mxu0 0
        %1395 = vmatpush.bf16.msra.mxu0 0
        %1396 = vmatpush.bf16.msra.mxu0 %v1340
        %1397 = vmatpush.bf16.msra.mxu0 %v1336
        %1398 = vmatmul.bf16.gmra.mxu0 %v1349
        %v1399 = vpop.f32.mrf.mxu0
        %v1400 = vadd.f32 %v1345, %v1399
        %v1401 = vpop.f32.mrf.mxu0
        %1402 = vdwg.mxu0
        %v1403 = vunpack.c.l.bf16 %v281
        %v1404 = vunpack.c.h.bf16 %v281
        %v1405 = vunpack.c.l.bf16 %v282
        %v1406 = vunpack.c.h.bf16 %v282
        %v1407 = vadd.f32 %v1361, %v1403
        %v1408 = vadd.f32 %v1374, %v1404
        %v1409 = vadd.f32 %v1387, %v1405
        %v1410 = vadd.f32 %v1400, %v1406
        %1411 = vst [vmem:[%s272] sm:$0xff] %v1407
        %1412 = vst [vmem:[%s272 + $0x8] sm:$0xff] %v1408
        %1413 = vst [vmem:[%s272 + $0x10] sm:$0xff] %v1409
        %1414 = vst [vmem:[%s272 + $0x18] sm:$0xff] %v1410
        %s1415 = sand.u32 %s181, 1
        %s1416 = scalar_lea.sflag [#allocation3], %s1415
        %s1417 = sand.u32 %s181, 1
        %s1418 = smul.addr %s1417, 32
        %s1419 = scalar_lea.vmem [#allocation2], %s1418
        // Predicated region
        $region49: #{tpu_custom_call.1} parent=47 // pred_check
          %p1420 = pneg %p191
        $region50: #{tpu_custom_call.1} parent=47 // pred_check_branch
          %1422 = sbr.rel (%p1420) target = $region52
        $region51: #{tpu_custom_call.1} parent=47 // pred_region
          %s1423 = smul.u32 4, %s21
          %1425 = vsyncadd %s1416, 0
          %s1426 = smul.addr %s1423, 8
          %s1427 = scalar_lea.hbm %s7, %s1426
          %s1429 = sshll.u32 %s1419, 4
          %s1430 = int_to_ptr.vmem [resolvable:$true] %s1429
          %s1431 = sshll.u32 %s1427, 4
          %s1432 = int_to_ptr.hbm [resolvable:$true] %s1431
          %1434 = dma.vmem_to_hbm [thread:$0]  %s1430, 512, %s1432, %s1416
        $region52: #{tpu_custom_call.1} parent=47 // pred_fallthru
          _
      $region48: #{tpu_custom_call.1} parent=5 // pred_fallthru
        _
      %p1435 = scmp.le.s32.totalorder 2, %s16
      // Predicated region
      $region53: #{tpu_custom_call.1} parent=5 // pred_check
        %p1436 = pneg %p1435
      $region54: #{tpu_custom_call.1} parent=5 // pred_check_branch
        %1438 = sbr.rel (%p1436) target = $region56
      $region55: #{tpu_custom_call.1} parent=5 // pred_region
        %s1439 = ssub.s32 %s16, 2
        // Predicated region
        $region57: #{tpu_custom_call.1} parent=55 // pred_check
          %p1440 = pneg %p197
        $region58: #{tpu_custom_call.1} parent=55 // pred_check_branch
          %1442 = sbr.rel (%p1440) target = $region60
        $region59: #{tpu_custom_call.1} parent=55 // pred_region
          %s1443 = sand.u32 %s182, 1
          %s1444 = scalar_lea.sflag [#allocation3], %s1443
          %s1445 = sand.u32 %s182, 1
          %s1446 = smul.addr %s1445, 32
          %s1447 = scalar_lea.vmem [#allocation2], %s1446
          %1449 = dma.done %s1444, 512
        $region60: #{tpu_custom_call.1} parent=55 // pred_fallthru
          _
      $region56: #{tpu_custom_call.1} parent=5 // pred_fallthru
        _
    $region6: #{tpu_custom_call.1} parent=1 // loop_footer
      %s20 = sadd.s32 1, %s16
    $region7: #{tpu_custom_call.1} parent=1 // loop_footer_branch
      %15 = sbr.rel target = $region3
    $region8: #{tpu_custom_call.1} parent=1 // loop_exit
      _
    %1450 = vsyncpa [#allocation3], 1
    %s1451 = scalar_lea.sflag [#allocation3], 1
    %1452 = vsyncpa %s1451, 1

</llo_original>
